<compile_context>
chip_gen: v5e
topology: v5e:2x2
jax: 0.10.0
libtpu: 0.0.40
codegen_flags: <defaults>
</compile_context>

<pallas_src>
import functools

import numpy as np
import jax
import jax.numpy as jnp
from jax.experimental import pallas as pl
from jax.experimental.pallas import tpu as pltpu


# ----------------------------------------------------------------------------
# Kernel
# ----------------------------------------------------------------------------
def _layer_norm(y, gamma, beta, eps):
    mean = jnp.mean(y, axis=-1, keepdims=True)
    var = jnp.mean((y - mean) ** 2, axis=-1, keepdims=True)
    return (y - mean) * jax.lax.rsqrt(var + eps) * gamma + beta


def _fft_stack_kernel(num_head, eps, compute_dtype,
                      # inputs
                      x_ref, npad_ref, kbias_ref,
                      wq_ref, bq_ref, wk_ref, bk_ref, wv_ref, bv_ref,
                      wfc_ref, bfc_ref, ln1g_ref, ln1b_ref,
                      w1_ref, b1_ref, w2_ref, b2_ref, ln2g_ref, ln2b_ref,
                      # output (also the layer-to-layer activation carry)
                      o_ref):
    layer = pl.program_id(1)

    # Seed the carried activation.  o_ref's block index is layer-invariant, so
    # the HBM writeback only happens at the batch-tile boundary.
    @pl.when(layer == 0)
    def _():
        o_ref[...] = x_ref[...].astype(o_ref.dtype)

    bt, s_len, e_dim = o_ref.shape
    h_dim = wq_ref.shape[-1]
    head_dim = h_dim // num_head
    ksize = w1_ref.shape[0]
    pad = (ksize - 1) // 2
    rows = bt * s_len

    x2 = o_ref[...].reshape(rows, e_dim).astype(jnp.float32)   # (Bt*S, E)
    npad2 = npad_ref[...].reshape(rows, 1)                     # (Bt*S, 1)
    kbias = kbias_ref[...]                                     # (Bt, 1, S) 0 / -1e30

    # ---------------- multi-head self attention ----------------
    xc = x2.astype(compute_dtype)
    q2 = jnp.dot(xc, wq_ref[...], preferred_element_type=jnp.float32) + bq_ref[...]
    k2 = jnp.dot(xc, wk_ref[...], preferred_element_type=jnp.float32) + bk_ref[...]
    v2 = jnp.dot(xc, wv_ref[...], preferred_element_type=jnp.float32) + bv_ref[...]
    # One lane-dense cast per tensor; per-head slices below need no more casts.
    q = q2.astype(compute_dtype).reshape(bt, s_len, h_dim)
    k = k2.astype(compute_dtype).reshape(bt, s_len, h_dim)
    v = v2.astype(compute_dtype).reshape(bt, s_len, h_dim)
    wfc = wfc_ref[...]

    use_concat = (head_dim % 128 == 0)
    approx = compute_dtype != jnp.float32
    head_outs = []
    attn_acc = None
    for h in range(num_head):
        sl = slice(h * head_dim, (h + 1) * head_dim)
        # 1/sqrt(head_dim) is pre-folded into Wq / bq in the wrapper.
        s = jnp.einsum('bqd,bkd->bqk', q[..., sl], k[..., sl],
                       preferred_element_type=jnp.float32)
        s = s + kbias                              # additive key-pad bias
        m = jnp.max(s, axis=-1, keepdims=True)
        p = jnp.exp(s - m)
        denom = jnp.sum(p, axis=-1, keepdims=True)
        # approx reciprocal (EUP) only in the low-precision path.
        a = p * pl.reciprocal(denom, approx=approx)
        oh = jnp.einsum('bqk,bkd->bqd', a.astype(compute_dtype), v[..., sl],
                        preferred_element_type=jnp.float32)
        if use_concat:
            head_outs.append(oh)
        else:
            # head_dim < 128: avoid the lane-concat; project each head through
            # its slice of wfc and accumulate in f32.
            contrib = jnp.dot(oh.reshape(rows, head_dim).astype(compute_dtype),
                              wfc[sl, :], preferred_element_type=jnp.float32)
            attn_acc = contrib if attn_acc is None else attn_acc + contrib
    if use_concat:
        attn = head_outs[0] if num_head == 1 else jnp.concatenate(head_outs, -1)
        attn_acc = jnp.dot(attn.reshape(rows, h_dim).astype(compute_dtype),
                           wfc, preferred_element_type=jnp.float32)

    y2 = attn_acc + bfc_ref[...] + x2              # output bias + residual
    y2 = _layer_norm(y2, ln1g_ref[...], ln1b_ref[...], eps) * npad2

    # ------------- Conv1DNet: conv(k=9, pad=4) -> ReLU -> conv(k=1) -------------
    # Padded k-tap conv as shifted matmuls; shifts use pltpu.roll along the
    # sublane (row) axis; per-tap masks zero rows that crossed a sample
    # boundary (== the zero padding of the reference conv).
    pos = jax.lax.broadcasted_iota(jnp.int32, (bt, s_len, 1), 1).reshape(rows, 1)
    hbuf = jnp.dot(y2.astype(compute_dtype), w1_ref[pad],
                   preferred_element_type=jnp.float32)        # centre tap (d = 0)
    for t in range(ksize):
        d = t - pad
        if d == 0:
            continue
        shifted = pltpu.roll(y2, shift=(-d) % rows, axis=0)   # row i <- row i + d
        valid = (pos < (s_len - d)) if d > 0 else (pos >= -d)
        tap = jnp.where(valid, shifted, 0.0).astype(compute_dtype)
        hbuf = hbuf + jnp.dot(tap, w1_ref[t], preferred_element_type=jnp.float32)
    hbuf = jnp.maximum(hbuf + b1_ref[...], 0.0)               # ReLU

    z2 = jnp.dot(hbuf.astype(compute_dtype), w2_ref[...],
                 preferred_element_type=jnp.float32) + b2_ref[...] + y2
    z2 = _layer_norm(z2, ln2g_ref[...], ln2b_ref[...], eps) * npad2

    # Carry to the next layer / final output (fully-padded rows stay zeroed
    # by the * npad2 multiplies above).
    o_ref[...] = z2.reshape(bt, s_len, e_dim).astype(o_ref.dtype)


# ----------------------------------------------------------------------------
# Wrapper (single fused pallas_call for the whole FFT stack)
# ----------------------------------------------------------------------------
def _tpu_kind():
    try:
        return jax.devices()[0].device_kind.lower()
    except Exception:
        return ""


def dencoder_forward_pallas(inp_seq, inp_seq_pos, emb_table, pos_table, layers,
                            num_head, head_dim, compute_dtype=jnp.bfloat16,
                            batch_tile=None, out_dtype=jnp.float32):
    """Encoder-mode Dencoder forward: inp_seq/inp_seq_pos are (B, S) int32."""
    B, S = inp_seq.shape
    E = emb_table.shape[1]
    L = len(layers)
    H = layers[0]['wq'].shape[1]
    INNER = layers[0]['w1'].shape[2]
    KSIZE = layers[0]['w1'].shape[0]

    # Embedding + positional encoding (gathers kept as XLA glue).
    x = (emb_table[inp_seq] + pos_table[inp_seq_pos]).astype(jnp.float32)

    # Pad masks: only O(S) per sample (no (B,S,S) mask is ever materialised).
    npad = (inp_seq != 0).astype(jnp.float32)[..., None]                   # (B,S,1)
    kbias = jnp.where(inp_seq == 0, jnp.float32(-1e30),
                      jnp.float32(0.0))[:, None, :]                        # (B,1,S)

    # Stack per-layer params with a leading layer axis; fold 1/sqrt(head_dim)
    # into Wq/bq; matmul weights go to the compute dtype, biases / LN stay f32.
    inv_scale = 1.0 / float(np.sqrt(head_dim))
    st = lambda name: jnp.stack([p[name] for p in layers])
    wq = (st('wq') * inv_scale).astype(compute_dtype)
    bq = (st('bq') * inv_scale).astype(jnp.float32)
    wk = st('wk').astype(compute_dtype);   bk = st('bk').astype(jnp.float32)
    wv = st('wv').astype(compute_dtype);   bv = st('bv').astype(jnp.float32)
    wfc = st('wfc').astype(compute_dtype); bfc = st('bfc').astype(jnp.float32)
    ln1g = st('ln1_g').astype(jnp.float32); ln1b = st('ln1_b').astype(jnp.float32)
    w1 = st('w1').astype(compute_dtype);   b1 = st('b1').astype(jnp.float32)
    w2 = st('w2').astype(compute_dtype);   b2 = st('b2').astype(jnp.float32)
    ln2g = st('ln2_g').astype(jnp.float32); ln2b = st('ln2_b').astype(jnp.float32)

    # Generation-aware VMEM budget and batch-tile (matmul-M) target.
    kind = _tpu_kind()
    if "v7" in kind or "tpu7" in kind:
        vmem_limit, row_target, want_two_tiles = 48 * 2**20, 256, True
    elif "v6" in kind or "tpu6" in kind or "v5" in kind or "tpu5" in kind:
        vmem_limit, row_target, want_two_tiles = 100 * 2**20, 512, False
    else:
        vmem_limit, row_target, want_two_tiles = None, 256, False

    if batch_tile is None:
        batch_tile = max(1, min(B, -(-row_target // S)))
        if want_two_tiles and B >= 2:
            # nb >= 2 so the "parallel" batch axis can shard across v7x's cores
            batch_tile = max(1, min(batch_tile, -(-B // 2)))
    Bt = batch_tile
    nb = -(-B // Bt)
    Bp = nb * Bt
    if Bp != B:                                   # ragged batch -> zero-pad
        padb = Bp - B
        x = jnp.pad(x, ((0, padb), (0, 0), (0, 0)))
        npad = jnp.pad(npad, ((0, padb), (0, 0), (0, 0)))
        kbias = jnp.pad(kbias, ((0, padb), (0, 0), (0, 0)))

    act_map = lambda bi, l: (bi, 0, 0)
    w3_map = lambda bi, l: (l, 0, 0)
    w4_map = lambda bi, l: (l, 0, 0, 0)

    in_specs = [
        pl.BlockSpec((Bt, S, E), act_map),              # x
        pl.BlockSpec((Bt, S, 1), act_map),              # non-pad mask
        pl.BlockSpec((Bt, 1, S), act_map),              # key-pad additive bias
        pl.BlockSpec((None, E, H), w3_map),             # wq (pre-scaled)
        pl.BlockSpec((None, 1, H), w3_map),             # bq (pre-scaled)
        pl.BlockSpec((None, E, H), w3_map),             # wk
        pl.BlockSpec((None, 1, H), w3_map),             # bk
        pl.BlockSpec((None, E, H), w3_map),             # wv
        pl.BlockSpec((None, 1, H), w3_map),             # bv
        pl.BlockSpec((None, H, E), w3_map),             # wfc
        pl.BlockSpec((None, 1, E), w3_map),             # bfc
        pl.BlockSpec((None, 1, E), w3_map),             # ln1 gamma
        pl.BlockSpec((None, 1, E), w3_map),             # ln1 beta
        pl.BlockSpec((None, KSIZE, E, INNER), w4_map),  # conv1 weight (per tap)
        pl.BlockSpec((None, 1, INNER), w3_map),         # conv1 bias
        pl.BlockSpec((None, INNER, E), w3_map),         # conv2 weight
        pl.BlockSpec((None, 1, E), w3_map),             # conv2 bias
        pl.BlockSpec((None, 1, E), w3_map),             # ln2 gamma
        pl.BlockSpec((None, 1, E), w3_map),             # ln2 beta
    ]
    out_spec = pl.BlockSpec((Bt, S, E), act_map)

    # Advisory cost estimate for the XLA scheduler.
    flops_layer = (3 * 2 * S * E * H + 2 * 2 * S * S * H + 2 * S * H * E
                   + 2 * S * KSIZE * E * INNER + 2 * S * INNER * E)
    weights = (wq, bq, wk, bk, wv, bv, wfc, bfc, ln1g, ln1b,
               w1, b1, w2, b2, ln2g, ln2b)
    weight_bytes = sum(int(a.size) * a.dtype.itemsize for a in weights)
    cost = pl.CostEstimate(
        flops=int(Bp * L * flops_layer),
        transcendentals=int(Bp * L * num_head * S * S),
        bytes_accessed=int(2 * x.size * 4 + npad.size * 4 + kbias.size * 4
                           + nb * weight_bytes))

    cp_kwargs = dict(dimension_semantics=("parallel", "arbitrary"))
    if vmem_limit is not None:
        cp_kwargs["vmem_limit_bytes"] = int(vmem_limit)

    kernel = functools.partial(_fft_stack_kernel, num_head, 1e-5, compute_dtype)

    out = pl.pallas_call(
        kernel,
        out_shape=jax.ShapeDtypeStruct((Bp, S, E), out_dtype),
        grid=(nb, L),
        in_specs=in_specs,
        out_specs=out_spec,
        compiler_params=pltpu.CompilerParams(**cp_kwargs),
        cost_estimate=cost,
    )(x, npad, kbias, wq, bq, wk, bk, wv, bv, wfc, bfc, ln1g, ln1b,
      w1, b1, w2, b2, ln2g, ln2b)

    # self.linear is identity in Encoder mode.
    # TODO(synk): Decoder mode would apply a final (E -> mel_num) matmul here.
    return out[:B]


# ----------------------------------------------------------------------------
# Pure-JAX reference (same math as the PyTorch module) for correctness check
# ----------------------------------------------------------------------------
def ref_forward(inp_seq, inp_seq_pos, emb_table, pos_table, layers,
                num_head, head_dim):
    B, S = inp_seq.shape
    npad = (inp_seq != 0).astype(jnp.float32)[..., None]
    amask = jnp.broadcast_to((inp_seq == 0)[:, None, :], (B, S, S))
    x = emb_table[inp_seq] + pos_table[inp_seq_pos]
    scale = float(np.sqrt(head_dim))
    for p in layers:
        q = x @ p['wq'] + p['bq']
        k = x @ p['wk'] + p['bk']
        v = x @ p['wv'] + p['bv']
        out = jnp.zeros_like(x)
        for h in range(num_head):
            sl = slice(h * head_dim, (h + 1) * head_dim)
            s = jnp.einsum('bqd,bkd->bqk', q[..., sl], k[..., sl]) / scale
            s = jnp.where(amask, -jnp.inf, s)
            a = jax.nn.softmax(s, axis=-1)
            oh = jnp.einsum('bqk,bkd->bqd', a, v[..., sl])
            out = out + oh @ p['wfc'][sl, :]
        out = out + p['bfc']
        y = out + x
        mu = y.mean(-1, keepdims=True)
        var = ((y - mu) ** 2).mean(-1, keepdims=True)
        y = (y - mu) / jnp.sqrt(var + 1e-5) * p['ln1_g'] + p['ln1_b']
        x = y * npad
        xpad = jnp.pad(x, ((0, 0), (4, 4), (0, 0)))
        hcv = jnp.zeros((B, S, p['b1'].shape[1]), jnp.float32)
        for t in range(9):
            hcv = hcv + xpad[:, t:t + S, :] @ p['w1'][t]
        hcv = jnp.maximum(hcv + p['b1'], 0.0)
        y = hcv @ p['w2'] + p['b2'] + x
        mu = y.mean(-1, keepdims=True)
        var = ((y - mu) ** 2).mean(-1, keepdims=True)
        y = (y - mu) / jnp.sqrt(var + 1e-5) * p['ln2_g'] + p['ln2_b']
        x = y * npad
    return x


# ----------------------------------------------------------------------------
# Deterministic parameter construction
# ----------------------------------------------------------------------------
def build_sinusoid_table(max_seq_len, emb_dim):
    inds = np.arange(emb_dim) // 2
    div_term = np.power(10000.0, 2 * inds / emb_dim)
    positions = np.arange(max_seq_len + 1)
    table = np.outer(positions, 1.0 / div_term)
    table[:, 0::2] = np.sin(table[:, 0::2])
    table[:, 1::2] = np.cos(table[:, 1::2])
    table[0] = 0.0  # padding_idx = 0
    return jnp.asarray(table, jnp.float32)


def init_layers(key, num_layer, E, H, inner):
    layers = []
    for _ in range(num_layer):
        key, *ks = jax.random.split(key, 13)
        rn = lambda k, shape, s: jax.random.normal(k, shape, jnp.float32) * s
        layers.append(dict(
            wq=rn(ks[0], (E, H), 0.1),  bq=rn(ks[1], (1, H), 0.02),
            wk=rn(ks[2], (E, H), 0.1),  bk=rn(ks[3], (1, H), 0.02),
            wv=rn(ks[4], (E, H), 0.1),  bv=rn(ks[5], (1, H), 0.02),
            wfc=rn(ks[6], (H, E), 0.1), bfc=rn(ks[7], (1, E), 0.02),
            ln1_g=jnp.ones((1, E), jnp.float32), ln1_b=jnp.zeros((1, E), jnp.float32),
            w1=rn(ks[8], (9, E, inner), 0.05), b1=rn(ks[9], (1, inner), 0.02),
            w2=rn(ks[10], (inner, E), 0.05),   b2=rn(ks[11], (1, E), 0.02),
            ln2_g=jnp.ones((1, E), jnp.float32), ln2_b=jnp.zeros((1, E), jnp.float32),
        ))
    return layers


# ----------------------------------------------------------------------------
if __name__ == "__main__":
    # Small Encoder-mode configuration
    B, S = 2, 8
    E, H, NUM_HEAD = 32, 32, 2
    HEAD_DIM = H // NUM_HEAD
    INNER = 64
    VOCAB = 20
    MAX_SEQ_LEN = 16
    NUM_LAYER = 2

    key = jax.random.PRNGKey(0)
    k_emb, k_seq, k_layers = jax.random.split(key, 3)

    # token embedding with padding_idx = 0 (row 0 zeroed)
    emb_table = jax.random.normal(k_emb, (VOCAB, E), jnp.float32) * 0.3
    emb_table = emb_table.at[0].set(0.0)
    pos_table = build_sinusoid_table(MAX_SEQ_LEN, E)

    # integer input sequence with a couple of trailing pad (0) tokens
    inp_seq = jax.random.randint(k_seq, (B, S), 1, VOCAB).astype(jnp.int32)
    inp_seq = inp_seq.at[0, -2:].set(0)
    inp_seq = inp_seq.at[1, -1:].set(0)
    inp_seq_pos = jnp.where(inp_seq != 0,
                            jnp.arange(1, S + 1, dtype=jnp.int32)[None, :], 0)

    layers = init_layers(k_layers, NUM_LAYER, E, H, INNER)

    ref = np.asarray(jax.block_until_ready(
        ref_forward(inp_seq, inp_seq_pos, emb_table, pos_table,
                    layers, NUM_HEAD, HEAD_DIM)))

    # Strict correctness check with f32 matmul operands.
    out_f32 = dencoder_forward_pallas(inp_seq, inp_seq_pos, emb_table, pos_table,
                                      layers, NUM_HEAD, HEAD_DIM,
                                      compute_dtype=jnp.float32)
    out_f32 = np.asarray(jax.block_until_ready(out_f32))
    np.testing.assert_allclose(out_f32, ref, rtol=1e-4, atol=1e-4)

    # Performance configuration: bf16 matmul operands, f32 accumulation.
    out_bf16 = dencoder_forward_pallas(inp_seq, inp_seq_pos, emb_table, pos_table,
                                       layers, NUM_HEAD, HEAD_DIM,
                                       compute_dtype=jnp.bfloat16)
    out_bf16 = np.asarray(jax.block_until_ready(out_bf16))
    np.testing.assert_allclose(out_bf16, ref, rtol=5e-2, atol=5e-2)

    assert out_bf16.shape == (B, S, E)
    print("KERNEL_OK")
</pallas_src>

<mosaic_0001>
module attributes {stable_mosaic.version = 11 : i64} {
  func.func @_fft_stack_kernel(%arg0: i32, %arg1: i32, %arg2: memref<2x8x32xf32, #tpu.memory_space<vmem>>, %arg3: memref<2x8x1xf32, #tpu.memory_space<vmem>>, %arg4: memref<2x1x8xf32, #tpu.memory_space<vmem>>, %arg5: memref<1x32x32xf32, #tpu.memory_space<vmem>>, %arg6: memref<1x1x32xf32, #tpu.memory_space<vmem>>, %arg7: memref<1x32x32xf32, #tpu.memory_space<vmem>>, %arg8: memref<1x1x32xf32, #tpu.memory_space<vmem>>, %arg9: memref<1x32x32xf32, #tpu.memory_space<vmem>>, %arg10: memref<1x1x32xf32, #tpu.memory_space<vmem>>, %arg11: memref<1x32x32xf32, #tpu.memory_space<vmem>>, %arg12: memref<1x1x32xf32, #tpu.memory_space<vmem>>, %arg13: memref<1x1x32xf32, #tpu.memory_space<vmem>>, %arg14: memref<1x1x32xf32, #tpu.memory_space<vmem>>, %arg15: memref<1x9x32x64xf32, #tpu.memory_space<vmem>>, %arg16: memref<1x1x64xf32, #tpu.memory_space<vmem>>, %arg17: memref<1x64x32xf32, #tpu.memory_space<vmem>>, %arg18: memref<1x1x32xf32, #tpu.memory_space<vmem>>, %arg19: memref<1x1x32xf32, #tpu.memory_space<vmem>>, %arg20: memref<1x1x32xf32, #tpu.memory_space<vmem>>, %arg21: memref<2x8x32xf32, #tpu.memory_space<vmem>>) attributes {dimension_semantics = [#tpu.dimension_semantics<parallel>, #tpu.dimension_semantics<arbitrary>], iteration_bounds = array<i64: 1, 2>, scalar_prefetch = 0 : i64, scratch_operands = 0 : i64, tpu.core_type = #tpu.core_type<tc>, window_params = [{transform_indices = @transform_0, window_bounds = array<i64: 2, 8, 32>}, {transform_indices = @transform_1, window_bounds = array<i64: 2, 8, 1>}, {transform_indices = @transform_2, window_bounds = array<i64: 2, 1, 8>}, {transform_indices = @transform_3, window_bounds = array<i64: 1, 32, 32>}, {transform_indices = @transform_4, window_bounds = array<i64: 1, 1, 32>}, {transform_indices = @transform_5, window_bounds = array<i64: 1, 32, 32>}, {transform_indices = @transform_6, window_bounds = array<i64: 1, 1, 32>}, {transform_indices = @transform_7, window_bounds = array<i64: 1, 32, 32>}, {transform_indices = @transform_8, window_bounds = array<i64: 1, 1, 32>}, {transform_indices = @transform_9, window_bounds = array<i64: 1, 32, 32>}, {transform_indices = @transform_10, window_bounds = array<i64: 1, 1, 32>}, {transform_indices = @transform_11, window_bounds = array<i64: 1, 1, 32>}, {transform_indices = @transform_12, window_bounds = array<i64: 1, 1, 32>}, {transform_indices = @transform_13, window_bounds = array<i64: 1, 9, 32, 64>}, {transform_indices = @transform_14, window_bounds = array<i64: 1, 1, 64>}, {transform_indices = @transform_15, window_bounds = array<i64: 1, 64, 32>}, {transform_indices = @transform_16, window_bounds = array<i64: 1, 1, 32>}, {transform_indices = @transform_17, window_bounds = array<i64: 1, 1, 32>}, {transform_indices = @transform_18, window_bounds = array<i64: 1, 1, 32>}, {transform_indices = @transform_19, window_bounds = array<i64: 2, 8, 32>}]} {
    %c0_i32 = arith.constant 0 : i32
    %0 = arith.cmpi eq, %arg1, %c0_i32 : i32
    %1 = arith.extui %0 : i1 to i32
    %c0_i32_0 = arith.constant 0 : i32
    %2 = arith.cmpi ne, %1, %c0_i32_0 : i32
    scf.if %2 {
      %c0_131 = arith.constant 0 : index
      %c0_132 = arith.constant 0 : index
      %c0_133 = arith.constant 0 : index
      %245 = vector.load %arg2[%c0_131, %c0_132, %c0_133] : memref<2x8x32xf32, #tpu.memory_space<vmem>>, vector<2x8x32xf32>
      %c0_134 = arith.constant 0 : index
      %c0_135 = arith.constant 0 : index
      %c0_136 = arith.constant 0 : index
      %246 = vector.load %arg21[%c0_134, %c0_135, %c0_136] : memref<2x8x32xf32, #tpu.memory_space<vmem>>, vector<2x8x32xf32>
      tpu.vector_store %arg21[%c0_134, %c0_135, %c0_136], %245 {strides = array<i32>} : memref<2x8x32xf32, #tpu.memory_space<vmem>>, vector<2x8x32xf32>,
    } else {
    }
    %c0 = arith.constant 0 : index
    %c0_1 = arith.constant 0 : index
    %c0_2 = arith.constant 0 : index
    %3 = vector.load %arg21[%c0, %c0_1, %c0_2] : memref<2x8x32xf32, #tpu.memory_space<vmem>>, vector<2x8x32xf32>
    %4 = vector.shape_cast %3 : vector<2x8x32xf32> to vector<16x32xf32>
    %c0_3 = arith.constant 0 : index
    %c0_4 = arith.constant 0 : index
    %c0_5 = arith.constant 0 : index
    %5 = vector.load %arg3[%c0_3, %c0_4, %c0_5] : memref<2x8x1xf32, #tpu.memory_space<vmem>>, vector<2x8x1xf32>
    %6 = vector.shape_cast %5 : vector<2x8x1xf32> to vector<16x1xf32>
    %c0_6 = arith.constant 0 : index
    %c0_7 = arith.constant 0 : index
    %c0_8 = arith.constant 0 : index
    %7 = vector.load %arg4[%c0_6, %c0_7, %c0_8] : memref<2x1x8xf32, #tpu.memory_space<vmem>>, vector<2x1x8xf32>
    %c0_9 = arith.constant 0 : index
    %c0_10 = arith.constant 0 : index
    %c0_11 = arith.constant 0 : index
    %8 = vector.load %arg5[%c0_9, %c0_10, %c0_11] : memref<1x32x32xf32, #tpu.memory_space<vmem>>, vector<1x32x32xf32>
    %9 = vector.shape_cast %8 : vector<1x32x32xf32> to vector<32x32xf32>
    %cst = arith.constant dense<0.000000e+00> : vector<16x32xf32>
    %10 = tpu.matmul %4, %9, %cst {dimension_numbers = #tpu.dot_dimension_numbers<[1], [0], [0], [1], [0, 0, 1, 1], [], []>} : vector<16x32xf32>, vector<32x32xf32>, vector<16x32xf32> -> vector<16x32xf32>
    %c0_12 = arith.constant 0 : index
    %c0_13 = arith.constant 0 : index
    %c0_14 = arith.constant 0 : index
    %11 = vector.load %arg6[%c0_12, %c0_13, %c0_14] : memref<1x1x32xf32, #tpu.memory_space<vmem>>, vector<1x1x32xf32>
    %12 = vector.shape_cast %11 : vector<1x1x32xf32> to vector<1x32xf32>
    %13 = vector.broadcast %12 : vector<1x32xf32> to vector<16x32xf32>
    %14 = arith.addf %10, %13 : vector<16x32xf32>
    %c0_15 = arith.constant 0 : index
    %c0_16 = arith.constant 0 : index
    %c0_17 = arith.constant 0 : index
    %15 = vector.load %arg7[%c0_15, %c0_16, %c0_17] : memref<1x32x32xf32, #tpu.memory_space<vmem>>, vector<1x32x32xf32>
    %16 = vector.shape_cast %15 : vector<1x32x32xf32> to vector<32x32xf32>
    %cst_18 = arith.constant dense<0.000000e+00> : vector<16x32xf32>
    %17 = tpu.matmul %4, %16, %cst_18 {dimension_numbers = #tpu.dot_dimension_numbers<[1], [0], [0], [1], [0, 0, 1, 1], [], []>} : vector<16x32xf32>, vector<32x32xf32>, vector<16x32xf32> -> vector<16x32xf32>
    %c0_19 = arith.constant 0 : index
    %c0_20 = arith.constant 0 : index
    %c0_21 = arith.constant 0 : index
    %18 = vector.load %arg8[%c0_19, %c0_20, %c0_21] : memref<1x1x32xf32, #tpu.memory_space<vmem>>, vector<1x1x32xf32>
    %19 = vector.shape_cast %18 : vector<1x1x32xf32> to vector<1x32xf32>
    %20 = vector.broadcast %19 : vector<1x32xf32> to vector<16x32xf32>
    %21 = arith.addf %17, %20 : vector<16x32xf32>
    %c0_22 = arith.constant 0 : index
    %c0_23 = arith.constant 0 : index
    %c0_24 = arith.constant 0 : index
    %22 = vector.load %arg9[%c0_22, %c0_23, %c0_24] : memref<1x32x32xf32, #tpu.memory_space<vmem>>, vector<1x32x32xf32>
    %23 = vector.shape_cast %22 : vector<1x32x32xf32> to vector<32x32xf32>
    %cst_25 = arith.constant dense<0.000000e+00> : vector<16x32xf32>
    %24 = tpu.matmul %4, %23, %cst_25 {dimension_numbers = #tpu.dot_dimension_numbers<[1], [0], [0], [1], [0, 0, 1, 1], [], []>} : vector<16x32xf32>, vector<32x32xf32>, vector<16x32xf32> -> vector<16x32xf32>
    %c0_26 = arith.constant 0 : index
    %c0_27 = arith.constant 0 : index
    %c0_28 = arith.constant 0 : index
    %25 = vector.load %arg10[%c0_26, %c0_27, %c0_28] : memref<1x1x32xf32, #tpu.memory_space<vmem>>, vector<1x1x32xf32>
    %26 = vector.shape_cast %25 : vector<1x1x32xf32> to vector<1x32xf32>
    %27 = vector.broadcast %26 : vector<1x32xf32> to vector<16x32xf32>
    %28 = arith.addf %24, %27 : vector<16x32xf32>
    %29 = vector.shape_cast %14 : vector<16x32xf32> to vector<2x8x32xf32>
    %30 = vector.shape_cast %21 : vector<16x32xf32> to vector<2x8x32xf32>
    %31 = vector.shape_cast %28 : vector<16x32xf32> to vector<2x8x32xf32>
    %c0_29 = arith.constant 0 : index
    %c0_30 = arith.constant 0 : index
    %c0_31 = arith.constant 0 : index
    %32 = vector.load %arg11[%c0_29, %c0_30, %c0_31] : memref<1x32x32xf32, #tpu.memory_space<vmem>>, vector<1x32x32xf32>
    %33 = vector.shape_cast %32 : vector<1x32x32xf32> to vector<32x32xf32>
    %34 = vector.extract_strided_slice %29 {offsets = [0, 0, 0], sizes = [2, 8, 16], strides = [1, 1, 1]} : vector<2x8x32xf32> to vector<2x8x16xf32>
    %35 = vector.extract_strided_slice %30 {offsets = [0, 0, 0], sizes = [2, 8, 16], strides = [1, 1, 1]} : vector<2x8x32xf32> to vector<2x8x16xf32>
    "tpu.trace_start"() <{level = 10 : i32, message = "bqd,bkd->bqk"}> : () -> ()
    %cst_32 = arith.constant dense<0.000000e+00> : vector<2x8x8xf32>
    %36 = tpu.matmul %34, %35, %cst_32 {dimension_numbers = #tpu.dot_dimension_numbers<[2], [2], [1], [1], [0, 0, 0, 1, 1, 1], [0], [0]>} : vector<2x8x16xf32>, vector<2x8x16xf32>, vector<2x8x8xf32> -> vector<2x8x8xf32>
    "tpu.trace_stop"() : () -> ()
    %37 = vector.broadcast %7 : vector<2x1x8xf32> to vector<2x8x8xf32>
    %38 = arith.addf %36, %37 : vector<2x8x8xf32>
    %cst_33 = arith.constant dense<0xFF800000> : vector<2x8xf32>
    %39 = vector.multi_reduction <maximumf>, %38, %cst_33 [2] : vector<2x8x8xf32> to vector<2x8xf32>
    %40 = vector.shape_cast %39 : vector<2x8xf32> to vector<2x8x1xf32>
    %41 = vector.broadcast %40 : vector<2x8x1xf32> to vector<2x8x8xf32>
    %42 = arith.subf %38, %41 : vector<2x8x8xf32>
    %43 = math.exp %42 : vector<2x8x8xf32>
    %cst_34 = arith.constant dense<0.000000e+00> : vector<2x8xf32>
    %44 = vector.multi_reduction <add>, %43, %cst_34 [2] : vector<2x8x8xf32> to vector<2x8xf32>
    %45 = vector.shape_cast %44 : vector<2x8xf32> to vector<2x8x1xf32>
    %46 = tpu.reciprocal %45 : vector<2x8x1xf32> -> vector<2x8x1xf32>
    %47 = vector.broadcast %46 : vector<2x8x1xf32> to vector<2x8x8xf32>
    %48 = arith.mulf %43, %47 : vector<2x8x8xf32>
    %49 = vector.extract_strided_slice %31 {offsets = [0, 0, 0], sizes = [2, 8, 16], strides = [1, 1, 1]} : vector<2x8x32xf32> to vector<2x8x16xf32>
    "tpu.trace_start"() <{level = 10 : i32, message = "bqk,bkd->bqd"}> : () -> ()
    %cst_35 = arith.constant dense<0.000000e+00> : vector<2x8x16xf32>
    %50 = tpu.matmul %48, %49, %cst_35 {dimension_numbers = #tpu.dot_dimension_numbers<[2], [1], [1], [2], [0, 0, 0, 1, 1, 2], [0], [0]>} : vector<2x8x8xf32>, vector<2x8x16xf32>, vector<2x8x16xf32> -> vector<2x8x16xf32>
    "tpu.trace_stop"() : () -> ()
    %51 = vector.shape_cast %50 : vector<2x8x16xf32> to vector<16x16xf32>
    %52 = vector.extract_strided_slice %33 {offsets = [0, 0], sizes = [16, 32], strides = [1, 1]} : vector<32x32xf32> to vector<16x32xf32>
    %cst_36 = arith.constant dense<0.000000e+00> : vector<16x32xf32>
    %53 = tpu.matmul %51, %52, %cst_36 {dimension_numbers = #tpu.dot_dimension_numbers<[1], [0], [0], [1], [0, 0, 1, 1], [], []>} : vector<16x16xf32>, vector<16x32xf32>, vector<16x32xf32> -> vector<16x32xf32>
    %54 = vector.extract_strided_slice %29 {offsets = [0, 0, 16], sizes = [2, 8, 16], strides = [1, 1, 1]} : vector<2x8x32xf32> to vector<2x8x16xf32>
    %55 = vector.extract_strided_slice %30 {offsets = [0, 0, 16], sizes = [2, 8, 16], strides = [1, 1, 1]} : vector<2x8x32xf32> to vector<2x8x16xf32>
    "tpu.trace_start"() <{level = 10 : i32, message = "bqd,bkd->bqk"}> : () -> ()
    %cst_37 = arith.constant dense<0.000000e+00> : vector<2x8x8xf32>
    %56 = tpu.matmul %54, %55, %cst_37 {dimension_numbers = #tpu.dot_dimension_numbers<[2], [2], [1], [1], [0, 0, 0, 1, 1, 1], [0], [0]>} : vector<2x8x16xf32>, vector<2x8x16xf32>, vector<2x8x8xf32> -> vector<2x8x8xf32>
    "tpu.trace_stop"() : () -> ()
    %57 = vector.broadcast %7 : vector<2x1x8xf32> to vector<2x8x8xf32>
    %58 = arith.addf %56, %57 : vector<2x8x8xf32>
    %cst_38 = arith.constant dense<0xFF800000> : vector<2x8xf32>
    %59 = vector.multi_reduction <maximumf>, %58, %cst_38 [2] : vector<2x8x8xf32> to vector<2x8xf32>
    %60 = vector.shape_cast %59 : vector<2x8xf32> to vector<2x8x1xf32>
    %61 = vector.broadcast %60 : vector<2x8x1xf32> to vector<2x8x8xf32>
    %62 = arith.subf %58, %61 : vector<2x8x8xf32>
    %63 = math.exp %62 : vector<2x8x8xf32>
    %cst_39 = arith.constant dense<0.000000e+00> : vector<2x8xf32>
    %64 = vector.multi_reduction <add>, %63, %cst_39 [2] : vector<2x8x8xf32> to vector<2x8xf32>
    %65 = vector.shape_cast %64 : vector<2x8xf32> to vector<2x8x1xf32>
    %66 = tpu.reciprocal %65 : vector<2x8x1xf32> -> vector<2x8x1xf32>
    %67 = vector.broadcast %66 : vector<2x8x1xf32> to vector<2x8x8xf32>
    %68 = arith.mulf %63, %67 : vector<2x8x8xf32>
    %69 = vector.extract_strided_slice %31 {offsets = [0, 0, 16], sizes = [2, 8, 16], strides = [1, 1, 1]} : vector<2x8x32xf32> to vector<2x8x16xf32>
    "tpu.trace_start"() <{level = 10 : i32, message = "bqk,bkd->bqd"}> : () -> ()
    %cst_40 = arith.constant dense<0.000000e+00> : vector<2x8x16xf32>
    %70 = tpu.matmul %68, %69, %cst_40 {dimension_numbers = #tpu.dot_dimension_numbers<[2], [1], [1], [2], [0, 0, 0, 1, 1, 2], [0], [0]>} : vector<2x8x8xf32>, vector<2x8x16xf32>, vector<2x8x16xf32> -> vector<2x8x16xf32>
    "tpu.trace_stop"() : () -> ()
    %71 = vector.shape_cast %70 : vector<2x8x16xf32> to vector<16x16xf32>
    %72 = vector.extract_strided_slice %33 {offsets = [16, 0], sizes = [16, 32], strides = [1, 1]} : vector<32x32xf32> to vector<16x32xf32>
    %cst_41 = arith.constant dense<0.000000e+00> : vector<16x32xf32>
    %73 = tpu.matmul %71, %72, %cst_41 {dimension_numbers = #tpu.dot_dimension_numbers<[1], [0], [0], [1], [0, 0, 1, 1], [], []>} : vector<16x16xf32>, vector<16x32xf32>, vector<16x32xf32> -> vector<16x32xf32>
    %74 = arith.addf %53, %73 : vector<16x32xf32>
    %c0_42 = arith.constant 0 : index
    %c0_43 = arith.constant 0 : index
    %c0_44 = arith.constant 0 : index
    %75 = vector.load %arg12[%c0_42, %c0_43, %c0_44] : memref<1x1x32xf32, #tpu.memory_space<vmem>>, vector<1x1x32xf32>
    %76 = vector.shape_cast %75 : vector<1x1x32xf32> to vector<1x32xf32>
    %77 = vector.broadcast %76 : vector<1x32xf32> to vector<16x32xf32>
    %78 = arith.addf %74, %77 : vector<16x32xf32>
    %79 = arith.addf %78, %4 : vector<16x32xf32>
    %c0_45 = arith.constant 0 : index
    %c0_46 = arith.constant 0 : index
    %c0_47 = arith.constant 0 : index
    %80 = vector.load %arg13[%c0_45, %c0_46, %c0_47] : memref<1x1x32xf32, #tpu.memory_space<vmem>>, vector<1x1x32xf32>
    %81 = vector.shape_cast %80 : vector<1x1x32xf32> to vector<1x32xf32>
    %c0_48 = arith.constant 0 : index
    %c0_49 = arith.constant 0 : index
    %c0_50 = arith.constant 0 : index
    %82 = vector.load %arg14[%c0_48, %c0_49, %c0_50] : memref<1x1x32xf32, #tpu.memory_space<vmem>>, vector<1x1x32xf32>
    %83 = vector.shape_cast %82 : vector<1x1x32xf32> to vector<1x32xf32>
    %cst_51 = arith.constant dense<0.000000e+00> : vector<16xf32>
    %84 = vector.multi_reduction <add>, %79, %cst_51 [1] : vector<16x32xf32> to vector<16xf32>
    %85 = vector.shape_cast %84 : vector<16xf32> to vector<16x1xf32>
    %cst_52 = arith.constant 3.200000e+01 : f32
    %86 = vector.broadcast %cst_52 : f32 to vector<16x1xf32>
    %87 = arith.divf %85, %86 : vector<16x1xf32>
    %88 = vector.broadcast %87 : vector<16x1xf32> to vector<16x32xf32>
    %89 = arith.subf %79, %88 : vector<16x32xf32>
    %90 = arith.mulf %89, %89 : vector<16x32xf32>
    %cst_53 = arith.constant dense<0.000000e+00> : vector<16xf32>
    %91 = vector.multi_reduction <add>, %90, %cst_53 [1] : vector<16x32xf32> to vector<16xf32>
    %92 = vector.shape_cast %91 : vector<16xf32> to vector<16x1xf32>
    %cst_54 = arith.constant 3.200000e+01 : f32
    %93 = vector.broadcast %cst_54 : f32 to vector<16x1xf32>
    %94 = arith.divf %92, %93 : vector<16x1xf32>
    %95 = vector.broadcast %87 : vector<16x1xf32> to vector<16x32xf32>
    %96 = arith.subf %79, %95 : vector<16x32xf32>
    %cst_55 = arith.constant 9.99999974E-6 : f32
    %97 = vector.broadcast %cst_55 : f32 to vector<16x1xf32>
    %98 = arith.addf %94, %97 : vector<16x1xf32>
    %99 = math.rsqrt %98 : vector<16x1xf32>
    %100 = vector.broadcast %99 : vector<16x1xf32> to vector<16x32xf32>
    %101 = arith.mulf %96, %100 : vector<16x32xf32>
    %102 = vector.broadcast %81 : vector<1x32xf32> to vector<16x32xf32>
    %103 = arith.mulf %101, %102 : vector<16x32xf32>
    %104 = vector.broadcast %83 : vector<1x32xf32> to vector<16x32xf32>
    %105 = arith.addf %103, %104 : vector<16x32xf32>
    %106 = vector.broadcast %6 : vector<16x1xf32> to vector<16x32xf32>
    %107 = arith.mulf %105, %106 : vector<16x32xf32>
    %108 = tpu.iota {dimensions = array<i32: 1>} : vector<2x8x1xi32>
    %109 = vector.shape_cast %108 : vector<2x8x1xi32> to vector<16x1xi32>
    %c0_56 = arith.constant 0 : index
    %c4 = arith.constant 4 : index
    %c0_57 = arith.constant 0 : index
    %c0_58 = arith.constant 0 : index
    %110 = vector.load %arg15[%c0_56, %c4, %c0_57, %c0_58] : memref<1x9x32x64xf32, #tpu.memory_space<vmem>>, vector<1x1x32x64xf32>
    %111 = vector.shape_cast %110 : vector<1x1x32x64xf32> to vector<32x64xf32>
    %cst_59 = arith.constant dense<0.000000e+00> : vector<16x64xf32>
    %112 = tpu.matmul %107, %111, %cst_59 {dimension_numbers = #tpu.dot_dimension_numbers<[1], [0], [0], [1], [0, 0, 1, 1], [], []>} : vector<16x32xf32>, vector<32x64xf32>, vector<16x64xf32> -> vector<16x64xf32>
    %c4_i32 = arith.constant 4 : i32
    %113 = tpu.dynamic_rotate %107 by %c4_i32 dim 0 : vector<16x32xf32>, i32 -> vector<16x32xf32>
    %c4_i32_60 = arith.constant 4 : i32
    %114 = vector.broadcast %c4_i32_60 : i32 to vector<16x1xi32>
    %115 = arith.cmpi sge, %109, %114 : vector<16x1xi32>
    %cst_61 = arith.constant 0.000000e+00 : f32
    %116 = vector.shape_cast %115 : vector<16x1xi1> to vector<16x1xi1>
    %117 = vector.broadcast %116 : vector<16x1xi1> to vector<16x32xi1>
    %118 = vector.broadcast %cst_61 : f32 to vector<16x32xf32>
    %119 = arith.select %117, %113, %118 : vector<16x32xi1>, vector<16x32xf32>
    %c0_62 = arith.constant 0 : index
    %c0_63 = arith.constant 0 : index
    %c0_64 = arith.constant 0 : index
    %c0_65 = arith.constant 0 : index
    %120 = vector.load %arg15[%c0_62, %c0_63, %c0_64, %c0_65] : memref<1x9x32x64xf32, #tpu.memory_space<vmem>>, vector<1x1x32x64xf32>
    %121 = vector.shape_cast %120 : vector<1x1x32x64xf32> to vector<32x64xf32>
    %cst_66 = arith.constant dense<0.000000e+00> : vector<16x64xf32>
    %122 = tpu.matmul %119, %121, %cst_66 {dimension_numbers = #tpu.dot_dimension_numbers<[1], [0], [0], [1], [0, 0, 1, 1], [], []>} : vector<16x32xf32>, vector<32x64xf32>, vector<16x64xf32> -> vector<16x64xf32>
    %123 = arith.addf %112, %122 : vector<16x64xf32>
    %c3_i32 = arith.constant 3 : i32
    %124 = tpu.dynamic_rotate %107 by %c3_i32 dim 0 : vector<16x32xf32>, i32 -> vector<16x32xf32>
    %c3_i32_67 = arith.constant 3 : i32
    %125 = vector.broadcast %c3_i32_67 : i32 to vector<16x1xi32>
    %126 = arith.cmpi sge, %109, %125 : vector<16x1xi32>
    %cst_68 = arith.constant 0.000000e+00 : f32
    %127 = vector.shape_cast %126 : vector<16x1xi1> to vector<16x1xi1>
    %128 = vector.broadcast %127 : vector<16x1xi1> to vector<16x32xi1>
    %129 = vector.broadcast %cst_68 : f32 to vector<16x32xf32>
    %130 = arith.select %128, %124, %129 : vector<16x32xi1>, vector<16x32xf32>
    %c0_69 = arith.constant 0 : index
    %c1 = arith.constant 1 : index
    %c0_70 = arith.constant 0 : index
    %c0_71 = arith.constant 0 : index
    %131 = vector.load %arg15[%c0_69, %c1, %c0_70, %c0_71] : memref<1x9x32x64xf32, #tpu.memory_space<vmem>>, vector<1x1x32x64xf32>
    %132 = vector.shape_cast %131 : vector<1x1x32x64xf32> to vector<32x64xf32>
    %cst_72 = arith.constant dense<0.000000e+00> : vector<16x64xf32>
    %133 = tpu.matmul %130, %132, %cst_72 {dimension_numbers = #tpu.dot_dimension_numbers<[1], [0], [0], [1], [0, 0, 1, 1], [], []>} : vector<16x32xf32>, vector<32x64xf32>, vector<16x64xf32> -> vector<16x64xf32>
    %134 = arith.addf %123, %133 : vector<16x64xf32>
    %c2_i32 = arith.constant 2 : i32
    %135 = tpu.dynamic_rotate %107 by %c2_i32 dim 0 : vector<16x32xf32>, i32 -> vector<16x32xf32>
    %c2_i32_73 = arith.constant 2 : i32
    %136 = vector.broadcast %c2_i32_73 : i32 to vector<16x1xi32>
    %137 = arith.cmpi sge, %109, %136 : vector<16x1xi32>
    %cst_74 = arith.constant 0.000000e+00 : f32
    %138 = vector.shape_cast %137 : vector<16x1xi1> to vector<16x1xi1>
    %139 = vector.broadcast %138 : vector<16x1xi1> to vector<16x32xi1>
    %140 = vector.broadcast %cst_74 : f32 to vector<16x32xf32>
    %141 = arith.select %139, %135, %140 : vector<16x32xi1>, vector<16x32xf32>
    %c0_75 = arith.constant 0 : index
    %c2 = arith.constant 2 : index
    %c0_76 = arith.constant 0 : index
    %c0_77 = arith.constant 0 : index
    %142 = vector.load %arg15[%c0_75, %c2, %c0_76, %c0_77] : memref<1x9x32x64xf32, #tpu.memory_space<vmem>>, vector<1x1x32x64xf32>
    %143 = vector.shape_cast %142 : vector<1x1x32x64xf32> to vector<32x64xf32>
    %cst_78 = arith.constant dense<0.000000e+00> : vector<16x64xf32>
    %144 = tpu.matmul %141, %143, %cst_78 {dimension_numbers = #tpu.dot_dimension_numbers<[1], [0], [0], [1], [0, 0, 1, 1], [], []>} : vector<16x32xf32>, vector<32x64xf32>, vector<16x64xf32> -> vector<16x64xf32>
    %145 = arith.addf %134, %144 : vector<16x64xf32>
    %c1_i32 = arith.constant 1 : i32
    %146 = tpu.dynamic_rotate %107 by %c1_i32 dim 0 : vector<16x32xf32>, i32 -> vector<16x32xf32>
    %c1_i32_79 = arith.constant 1 : i32
    %147 = vector.broadcast %c1_i32_79 : i32 to vector<16x1xi32>
    %148 = arith.cmpi sge, %109, %147 : vector<16x1xi32>
    %cst_80 = arith.constant 0.000000e+00 : f32
    %149 = vector.shape_cast %148 : vector<16x1xi1> to vector<16x1xi1>
    %150 = vector.broadcast %149 : vector<16x1xi1> to vector<16x32xi1>
    %151 = vector.broadcast %cst_80 : f32 to vector<16x32xf32>
    %152 = arith.select %150, %146, %151 : vector<16x32xi1>, vector<16x32xf32>
    %c0_81 = arith.constant 0 : index
    %c3 = arith.constant 3 : index
    %c0_82 = arith.constant 0 : index
    %c0_83 = arith.constant 0 : index
    %153 = vector.load %arg15[%c0_81, %c3, %c0_82, %c0_83] : memref<1x9x32x64xf32, #tpu.memory_space<vmem>>, vector<1x1x32x64xf32>
    %154 = vector.shape_cast %153 : vector<1x1x32x64xf32> to vector<32x64xf32>
    %cst_84 = arith.constant dense<0.000000e+00> : vector<16x64xf32>
    %155 = tpu.matmul %152, %154, %cst_84 {dimension_numbers = #tpu.dot_dimension_numbers<[1], [0], [0], [1], [0, 0, 1, 1], [], []>} : vector<16x32xf32>, vector<32x64xf32>, vector<16x64xf32> -> vector<16x64xf32>
    %156 = arith.addf %145, %155 : vector<16x64xf32>
    %c15_i32 = arith.constant 15 : i32
    %157 = tpu.dynamic_rotate %107 by %c15_i32 dim 0 : vector<16x32xf32>, i32 -> vector<16x32xf32>
    %c7_i32 = arith.constant 7 : i32
    %158 = vector.broadcast %c7_i32 : i32 to vector<16x1xi32>
    %159 = arith.cmpi slt, %109, %158 : vector<16x1xi32>
    %cst_85 = arith.constant 0.000000e+00 : f32
    %160 = vector.shape_cast %159 : vector<16x1xi1> to vector<16x1xi1>
    %161 = vector.broadcast %160 : vector<16x1xi1> to vector<16x32xi1>
    %162 = vector.broadcast %cst_85 : f32 to vector<16x32xf32>
    %163 = arith.select %161, %157, %162 : vector<16x32xi1>, vector<16x32xf32>
    %c0_86 = arith.constant 0 : index
    %c5 = arith.constant 5 : index
    %c0_87 = arith.constant 0 : index
    %c0_88 = arith.constant 0 : index
    %164 = vector.load %arg15[%c0_86, %c5, %c0_87, %c0_88] : memref<1x9x32x64xf32, #tpu.memory_space<vmem>>, vector<1x1x32x64xf32>
    %165 = vector.shape_cast %164 : vector<1x1x32x64xf32> to vector<32x64xf32>
    %cst_89 = arith.constant dense<0.000000e+00> : vector<16x64xf32>
    %166 = tpu.matmul %163, %165, %cst_89 {dimension_numbers = #tpu.dot_dimension_numbers<[1], [0], [0], [1], [0, 0, 1, 1], [], []>} : vector<16x32xf32>, vector<32x64xf32>, vector<16x64xf32> -> vector<16x64xf32>
    %167 = arith.addf %156, %166 : vector<16x64xf32>
    %c14_i32 = arith.constant 14 : i32
    %168 = tpu.dynamic_rotate %107 by %c14_i32 dim 0 : vector<16x32xf32>, i32 -> vector<16x32xf32>
    %c6_i32 = arith.constant 6 : i32
    %169 = vector.broadcast %c6_i32 : i32 to vector<16x1xi32>
    %170 = arith.cmpi slt, %109, %169 : vector<16x1xi32>
    %cst_90 = arith.constant 0.000000e+00 : f32
    %171 = vector.shape_cast %170 : vector<16x1xi1> to vector<16x1xi1>
    %172 = vector.broadcast %171 : vector<16x1xi1> to vector<16x32xi1>
    %173 = vector.broadcast %cst_90 : f32 to vector<16x32xf32>
    %174 = arith.select %172, %168, %173 : vector<16x32xi1>, vector<16x32xf32>
    %c0_91 = arith.constant 0 : index
    %c6 = arith.constant 6 : index
    %c0_92 = arith.constant 0 : index
    %c0_93 = arith.constant 0 : index
    %175 = vector.load %arg15[%c0_91, %c6, %c0_92, %c0_93] : memref<1x9x32x64xf32, #tpu.memory_space<vmem>>, vector<1x1x32x64xf32>
    %176 = vector.shape_cast %175 : vector<1x1x32x64xf32> to vector<32x64xf32>
    %cst_94 = arith.constant dense<0.000000e+00> : vector<16x64xf32>
    %177 = tpu.matmul %174, %176, %cst_94 {dimension_numbers = #tpu.dot_dimension_numbers<[1], [0], [0], [1], [0, 0, 1, 1], [], []>} : vector<16x32xf32>, vector<32x64xf32>, vector<16x64xf32> -> vector<16x64xf32>
    %178 = arith.addf %167, %177 : vector<16x64xf32>
    %c13_i32 = arith.constant 13 : i32
    %179 = tpu.dynamic_rotate %107 by %c13_i32 dim 0 : vector<16x32xf32>, i32 -> vector<16x32xf32>
    %c5_i32 = arith.constant 5 : i32
    %180 = vector.broadcast %c5_i32 : i32 to vector<16x1xi32>
    %181 = arith.cmpi slt, %109, %180 : vector<16x1xi32>
    %cst_95 = arith.constant 0.000000e+00 : f32
    %182 = vector.shape_cast %181 : vector<16x1xi1> to vector<16x1xi1>
    %183 = vector.broadcast %182 : vector<16x1xi1> to vector<16x32xi1>
    %184 = vector.broadcast %cst_95 : f32 to vector<16x32xf32>
    %185 = arith.select %183, %179, %184 : vector<16x32xi1>, vector<16x32xf32>
    %c0_96 = arith.constant 0 : index
    %c7 = arith.constant 7 : index
    %c0_97 = arith.constant 0 : index
    %c0_98 = arith.constant 0 : index
    %186 = vector.load %arg15[%c0_96, %c7, %c0_97, %c0_98] : memref<1x9x32x64xf32, #tpu.memory_space<vmem>>, vector<1x1x32x64xf32>
    %187 = vector.shape_cast %186 : vector<1x1x32x64xf32> to vector<32x64xf32>
    %cst_99 = arith.constant dense<0.000000e+00> : vector<16x64xf32>
    %188 = tpu.matmul %185, %187, %cst_99 {dimension_numbers = #tpu.dot_dimension_numbers<[1], [0], [0], [1], [0, 0, 1, 1], [], []>} : vector<16x32xf32>, vector<32x64xf32>, vector<16x64xf32> -> vector<16x64xf32>
    %189 = arith.addf %178, %188 : vector<16x64xf32>
    %c12_i32 = arith.constant 12 : i32
    %190 = tpu.dynamic_rotate %107 by %c12_i32 dim 0 : vector<16x32xf32>, i32 -> vector<16x32xf32>
    %c4_i32_100 = arith.constant 4 : i32
    %191 = vector.broadcast %c4_i32_100 : i32 to vector<16x1xi32>
    %192 = arith.cmpi slt, %109, %191 : vector<16x1xi32>
    %cst_101 = arith.constant 0.000000e+00 : f32
    %193 = vector.shape_cast %192 : vector<16x1xi1> to vector<16x1xi1>
    %194 = vector.broadcast %193 : vector<16x1xi1> to vector<16x32xi1>
    %195 = vector.broadcast %cst_101 : f32 to vector<16x32xf32>
    %196 = arith.select %194, %190, %195 : vector<16x32xi1>, vector<16x32xf32>
    %c0_102 = arith.constant 0 : index
    %c8 = arith.constant 8 : index
    %c0_103 = arith.constant 0 : index
    %c0_104 = arith.constant 0 : index
    %197 = vector.load %arg15[%c0_102, %c8, %c0_103, %c0_104] : memref<1x9x32x64xf32, #tpu.memory_space<vmem>>, vector<1x1x32x64xf32>
    %198 = vector.shape_cast %197 : vector<1x1x32x64xf32> to vector<32x64xf32>
    %cst_105 = arith.constant dense<0.000000e+00> : vector<16x64xf32>
    %199 = tpu.matmul %196, %198, %cst_105 {dimension_numbers = #tpu.dot_dimension_numbers<[1], [0], [0], [1], [0, 0, 1, 1], [], []>} : vector<16x32xf32>, vector<32x64xf32>, vector<16x64xf32> -> vector<16x64xf32>
    %200 = arith.addf %189, %199 : vector<16x64xf32>
    %c0_106 = arith.constant 0 : index
    %c0_107 = arith.constant 0 : index
    %c0_108 = arith.constant 0 : index
    %201 = vector.load %arg16[%c0_106, %c0_107, %c0_108] : memref<1x1x64xf32, #tpu.memory_space<vmem>>, vector<1x1x64xf32>
    %202 = vector.shape_cast %201 : vector<1x1x64xf32> to vector<1x64xf32>
    %203 = vector.broadcast %202 : vector<1x64xf32> to vector<16x64xf32>
    %204 = arith.addf %200, %203 : vector<16x64xf32>
    %cst_109 = arith.constant 0.000000e+00 : f32
    %205 = vector.broadcast %cst_109 : f32 to vector<16x64xf32>
    %206 = arith.maximumf %204, %205 : vector<16x64xf32>
    %c0_110 = arith.constant 0 : index
    %c0_111 = arith.constant 0 : index
    %c0_112 = arith.constant 0 : index
    %207 = vector.load %arg17[%c0_110, %c0_111, %c0_112] : memref<1x64x32xf32, #tpu.memory_space<vmem>>, vector<1x64x32xf32>
    %208 = vector.shape_cast %207 : vector<1x64x32xf32> to vector<64x32xf32>
    %cst_113 = arith.constant dense<0.000000e+00> : vector<16x32xf32>
    %209 = tpu.matmul %206, %208, %cst_113 {dimension_numbers = #tpu.dot_dimension_numbers<[1], [0], [0], [1], [0, 0, 1, 1], [], []>} : vector<16x64xf32>, vector<64x32xf32>, vector<16x32xf32> -> vector<16x32xf32>
    %c0_114 = arith.constant 0 : index
    %c0_115 = arith.constant 0 : index
    %c0_116 = arith.constant 0 : index
    %210 = vector.load %arg18[%c0_114, %c0_115, %c0_116] : memref<1x1x32xf32, #tpu.memory_space<vmem>>, vector<1x1x32xf32>
    %211 = vector.shape_cast %210 : vector<1x1x32xf32> to vector<1x32xf32>
    %212 = vector.broadcast %211 : vector<1x32xf32> to vector<16x32xf32>
    %213 = arith.addf %209, %212 : vector<16x32xf32>
    %214 = arith.addf %213, %107 : vector<16x32xf32>
    %c0_117 = arith.constant 0 : index
    %c0_118 = arith.constant 0 : index
    %c0_119 = arith.constant 0 : index
    %215 = vector.load %arg19[%c0_117, %c0_118, %c0_119] : memref<1x1x32xf32, #tpu.memory_space<vmem>>, vector<1x1x32xf32>
    %216 = vector.shape_cast %215 : vector<1x1x32xf32> to vector<1x32xf32>
    %c0_120 = arith.constant 0 : index
    %c0_121 = arith.constant 0 : index
    %c0_122 = arith.constant 0 : index
    %217 = vector.load %arg20[%c0_120, %c0_121, %c0_122] : memref<1x1x32xf32, #tpu.memory_space<vmem>>, vector<1x1x32xf32>
    %218 = vector.shape_cast %217 : vector<1x1x32xf32> to vector<1x32xf32>
    %cst_123 = arith.constant dense<0.000000e+00> : vector<16xf32>
    %219 = vector.multi_reduction <add>, %214, %cst_123 [1] : vector<16x32xf32> to vector<16xf32>
    %220 = vector.shape_cast %219 : vector<16xf32> to vector<16x1xf32>
    %cst_124 = arith.constant 3.200000e+01 : f32
    %221 = vector.broadcast %cst_124 : f32 to vector<16x1xf32>
    %222 = arith.divf %220, %221 : vector<16x1xf32>
    %223 = vector.broadcast %222 : vector<16x1xf32> to vector<16x32xf32>
    %224 = arith.subf %214, %223 : vector<16x32xf32>
    %225 = arith.mulf %224, %224 : vector<16x32xf32>
    %cst_125 = arith.constant dense<0.000000e+00> : vector<16xf32>
    %226 = vector.multi_reduction <add>, %225, %cst_125 [1] : vector<16x32xf32> to vector<16xf32>
    %227 = vector.shape_cast %226 : vector<16xf32> to vector<16x1xf32>
    %cst_126 = arith.constant 3.200000e+01 : f32
    %228 = vector.broadcast %cst_126 : f32 to vector<16x1xf32>
    %229 = arith.divf %227, %228 : vector<16x1xf32>
    %230 = vector.broadcast %222 : vector<16x1xf32> to vector<16x32xf32>
    %231 = arith.subf %214, %230 : vector<16x32xf32>
    %cst_127 = arith.constant 9.99999974E-6 : f32
    %232 = vector.broadcast %cst_127 : f32 to vector<16x1xf32>
    %233 = arith.addf %229, %232 : vector<16x1xf32>
    %234 = math.rsqrt %233 : vector<16x1xf32>
    %235 = vector.broadcast %234 : vector<16x1xf32> to vector<16x32xf32>
    %236 = arith.mulf %231, %235 : vector<16x32xf32>
    %237 = vector.broadcast %216 : vector<1x32xf32> to vector<16x32xf32>
    %238 = arith.mulf %236, %237 : vector<16x32xf32>
    %239 = vector.broadcast %218 : vector<1x32xf32> to vector<16x32xf32>
    %240 = arith.addf %238, %239 : vector<16x32xf32>
    %241 = vector.broadcast %6 : vector<16x1xf32> to vector<16x32xf32>
    %242 = arith.mulf %240, %241 : vector<16x32xf32>
    %243 = vector.shape_cast %242 : vector<16x32xf32> to vector<2x8x32xf32>
    %c0_128 = arith.constant 0 : index
    %c0_129 = arith.constant 0 : index
    %c0_130 = arith.constant 0 : index
    %244 = vector.load %arg21[%c0_128, %c0_129, %c0_130] : memref<2x8x32xf32, #tpu.memory_space<vmem>>, vector<2x8x32xf32>
    tpu.vector_store %arg21[%c0_128, %c0_129, %c0_130], %243 {strides = array<i32>} : memref<2x8x32xf32, #tpu.memory_space<vmem>>, vector<2x8x32xf32>,
    return
  }
  func.func @transform_0(%arg0: i32, %arg1: i32) -> (i32, i32, i32) {
    %c0_i32 = arith.constant 0 : i32
    %c0_i32_0 = arith.constant 0 : i32
    %c0_i32_1 = arith.constant 0 : i32
    return %arg0, %c0_i32, %c0_i32_0 : i32, i32, i32
  }
  func.func @transform_1(%arg0: i32, %arg1: i32) -> (i32, i32, i32) {
    %c0_i32 = arith.constant 0 : i32
    %c0_i32_0 = arith.constant 0 : i32
    %c0_i32_1 = arith.constant 0 : i32
    return %arg0, %c0_i32, %c0_i32_0 : i32, i32, i32
  }
  func.func @transform_2(%arg0: i32, %arg1: i32) -> (i32, i32, i32) {
    %c0_i32 = arith.constant 0 : i32
    %c0_i32_0 = arith.constant 0 : i32
    %c0_i32_1 = arith.constant 0 : i32
    return %arg0, %c0_i32, %c0_i32_0 : i32, i32, i32
  }
  func.func @transform_3(%arg0: i32, %arg1: i32) -> (i32, i32, i32) {
    %c0_i32 = arith.constant 0 : i32
    %c0_i32_0 = arith.constant 0 : i32
    %c0_i32_1 = arith.constant 0 : i32
    return %arg1, %c0_i32, %c0_i32_0 : i32, i32, i32
  }
  func.func @transform_4(%arg0: i32, %arg1: i32) -> (i32, i32, i32) {
    %c0_i32 = arith.constant 0 : i32
    %c0_i32_0 = arith.constant 0 : i32
    %c0_i32_1 = arith.constant 0 : i32
    return %arg1, %c0_i32, %c0_i32_0 : i32, i32, i32
  }
  func.func @transform_5(%arg0: i32, %arg1: i32) -> (i32, i32, i32) {
    %c0_i32 = arith.constant 0 : i32
    %c0_i32_0 = arith.constant 0 : i32
    %c0_i32_1 = arith.constant 0 : i32
    return %arg1, %c0_i32, %c0_i32_0 : i32, i32, i32
  }
  func.func @transform_6(%arg0: i32, %arg1: i32) -> (i32, i32, i32) {
    %c0_i32 = arith.constant 0 : i32
    %c0_i32_0 = arith.constant 0 : i32
    %c0_i32_1 = arith.constant 0 : i32
    return %arg1, %c0_i32, %c0_i32_0 : i32, i32, i32
  }
  func.func @transform_7(%arg0: i32, %arg1: i32) -> (i32, i32, i32) {
    %c0_i32 = arith.constant 0 : i32
    %c0_i32_0 = arith.constant 0 : i32
    %c0_i32_1 = arith.constant 0 : i32
    return %arg1, %c0_i32, %c0_i32_0 : i32, i32, i32
  }
  func.func @transform_8(%arg0: i32, %arg1: i32) -> (i32, i32, i32) {
    %c0_i32 = arith.constant 0 : i32
    %c0_i32_0 = arith.constant 0 : i32
    %c0_i32_1 = arith.constant 0 : i32
    return %arg1, %c0_i32, %c0_i32_0 : i32, i32, i32
  }
  func.func @transform_9(%arg0: i32, %arg1: i32) -> (i32, i32, i32) {
    %c0_i32 = arith.constant 0 : i32
    %c0_i32_0 = arith.constant 0 : i32
    %c0_i32_1 = arith.constant 0 : i32
    return %arg1, %c0_i32, %c0_i32_0 : i32, i32, i32
  }
  func.func @transform_10(%arg0: i32, %arg1: i32) -> (i32, i32, i32) {
    %c0_i32 = arith.constant 0 : i32
    %c0_i32_0 = arith.constant 0 : i32
    %c0_i32_1 = arith.constant 0 : i32
    return %arg1, %c0_i32, %c0_i32_0 : i32, i32, i32
  }
  func.func @transform_11(%arg0: i32, %arg1: i32) -> (i32, i32, i32) {
    %c0_i32 = arith.constant 0 : i32
    %c0_i32_0 = arith.constant 0 : i32
    %c0_i32_1 = arith.constant 0 : i32
    return %arg1, %c0_i32, %c0_i32_0 : i32, i32, i32
  }
  func.func @transform_12(%arg0: i32, %arg1: i32) -> (i32, i32, i32) {
    %c0_i32 = arith.constant 0 : i32
    %c0_i32_0 = arith.constant 0 : i32
    %c0_i32_1 = arith.constant 0 : i32
    return %arg1, %c0_i32, %c0_i32_0 : i32, i32, i32
  }
  func.func @transform_13(%arg0: i32, %arg1: i32) -> (i32, i32, i32, i32) {
    %c0_i32 = arith.constant 0 : i32
    %c0_i32_0 = arith.constant 0 : i32
    %c0_i32_1 = arith.constant 0 : i32
    %c0_i32_2 = arith.constant 0 : i32
    return %arg1, %c0_i32, %c0_i32_0, %c0_i32_1 : i32, i32, i32, i32
  }
  func.func @transform_14(%arg0: i32, %arg1: i32) -> (i32, i32, i32) {
    %c0_i32 = arith.constant 0 : i32
    %c0_i32_0 = arith.constant 0 : i32
    %c0_i32_1 = arith.constant 0 : i32
    return %arg1, %c0_i32, %c0_i32_0 : i32, i32, i32
  }
  func.func @transform_15(%arg0: i32, %arg1: i32) -> (i32, i32, i32) {
    %c0_i32 = arith.constant 0 : i32
    %c0_i32_0 = arith.constant 0 : i32
    %c0_i32_1 = arith.constant 0 : i32
    return %arg1, %c0_i32, %c0_i32_0 : i32, i32, i32
  }
  func.func @transform_16(%arg0: i32, %arg1: i32) -> (i32, i32, i32) {
    %c0_i32 = arith.constant 0 : i32
    %c0_i32_0 = arith.constant 0 : i32
    %c0_i32_1 = arith.constant 0 : i32
    return %arg1, %c0_i32, %c0_i32_0 : i32, i32, i32
  }
  func.func @transform_17(%arg0: i32, %arg1: i32) -> (i32, i32, i32) {
    %c0_i32 = arith.constant 0 : i32
    %c0_i32_0 = arith.constant 0 : i32
    %c0_i32_1 = arith.constant 0 : i32
    return %arg1, %c0_i32, %c0_i32_0 : i32, i32, i32
  }
  func.func @transform_18(%arg0: i32, %arg1: i32) -> (i32, i32, i32) {
    %c0_i32 = arith.constant 0 : i32
    %c0_i32_0 = arith.constant 0 : i32
    %c0_i32_1 = arith.constant 0 : i32
    return %arg1, %c0_i32, %c0_i32_0 : i32, i32, i32
  }
  func.func @transform_19(%arg0: i32, %arg1: i32) -> (i32, i32, i32) {
    %c0_i32 = arith.constant 0 : i32
    %c0_i32_0 = arith.constant 0 : i32
    %c0_i32_1 = arith.constant 0 : i32
    return %arg0, %c0_i32, %c0_i32_0 : i32, i32, i32
  }
}

</mosaic_0001>

<llo_original>
// kernel: tpu_custom_call.1
$region0: #{tpu_custom_call.1}
  #allocation0 [shape = 'u32[]', space=smem, size = 0x4, offset = 0x4, fixed_abs, tag = 'smem constant byte address 0x4 - core index']
  #allocation1 [shape = 'u32[72,128]{1,0:T(1,128)}', space=vmem, size = 0x9000, scoped, tag = 'internal scratch']
  %s0 = inlined_call_operand.vmem [shape: f32[2,8,32], index: 0, kind: input, shape index: {}]
  %s1 = inlined_call_operand.vmem [shape: f32[2,8,1], index: 1, kind: input, shape index: {}]
  %s2 = inlined_call_operand.vmem [shape: f32[2,1,8], index: 2, kind: input, shape index: {}]
  %s3 = inlined_call_operand.vmem [shape: f32[2,32,32], index: 3, kind: input, shape index: {}]
  %s4 = inlined_call_operand.vmem [shape: f32[2,1,32], index: 4, kind: input, shape index: {}]
  %s5 = inlined_call_operand.vmem [shape: f32[2,32,32], index: 5, kind: input, shape index: {}]
  %s6 = inlined_call_operand.vmem [shape: f32[2,1,32], index: 6, kind: input, shape index: {}]
  %s7 = inlined_call_operand.vmem [shape: f32[2,32,32], index: 7, kind: input, shape index: {}]
  %s8 = inlined_call_operand.hbm [shape: f32[2,1,32], index: 8, kind: input, shape index: {}]
  %s9 = inlined_call_operand.hbm [shape: f32[2,32,32], index: 9, kind: input, shape index: {}]
  %s10 = inlined_call_operand.vmem [shape: f32[2,1,32], index: 10, kind: input, shape index: {}]
  %s11 = inlined_call_operand.vmem [shape: f32[2,1,32], index: 11, kind: input, shape index: {}]
  %s12 = inlined_call_operand.vmem [shape: f32[2,1,32], index: 12, kind: input, shape index: {}]
  %s13 = inlined_call_operand.hbm [shape: f32[2,9,32,64], index: 13, kind: input, shape index: {}]
  %s14 = inlined_call_operand.hbm [shape: f32[2,1,64], index: 14, kind: input, shape index: {}]
  %s15 = inlined_call_operand.vmem [shape: f32[2,64,32], index: 15, kind: input, shape index: {}]
  %s16 = inlined_call_operand.vmem [shape: f32[2,1,32], index: 16, kind: input, shape index: {}]
  %s17 = inlined_call_operand.vmem [shape: f32[2,1,32], index: 17, kind: input, shape index: {}]
  %s18 = inlined_call_operand.vmem [shape: f32[2,1,32], index: 18, kind: input, shape index: {}]
  %s19 = inlined_call_operand.hbm [shape: f32[2,8,32], index: 19, kind: output, shape index: {}]
  %s20 = sld [smem:[#allocation0]]
  $region129: #{tpu_custom_call.1} parent=0
    _
  %s22 = ssub.s32 1, %s20
  %s23 = scalar_select 0, %s22, %s20
  $region1: #{tpu_custom_call.1} parent=0
    #allocation2 [shape = 'u8[1024]{0}', space=vmem, size = 0x400, scoped, tag = 'input window, operand 8']
    #allocation3 [shape = 's32[2]{0}', space=sflag, size = 0x8, scoped, tag = 'scoped memory for tpu_custom_call.1']
    #allocation4 [shape = 's32[2]{0}', space=sflag, size = 0x8, scoped, tag = 'scoped memory for tpu_custom_call.1']
    #allocation5 [shape = 'u8[32768]{0}', space=vmem, size = 0x8000, scoped, tag = 'input window, operand 9']
    #allocation6 [shape = 's32[2]{0}', space=sflag, size = 0x8, scoped, tag = 'scoped memory for tpu_custom_call.1']
    #allocation7 [shape = 'u8[294912]{0}', space=vmem, size = 0x48000, scoped, tag = 'input window, operand 13']
    #allocation8 [shape = 'u8[1024]{0}', space=vmem, size = 0x400, scoped, tag = 'input window, operand 14']
    #allocation9 [shape = 's32[2]{0}', space=sflag, size = 0x8, scoped, tag = 'scoped memory for tpu_custom_call.1']
    #allocation10 [shape = 'u8[8192]{0}', space=vmem, size = 0x2000, scoped, tag = 'output window, operand 0, single buffered']
    %24 = vsyncpa [#allocation3], 0
    %s25 = scalar_lea.sflag [#allocation3], 1
    %26 = vsyncpa %s25, 0
    %27 = vsyncpa [#allocation6], 0
    %s28 = scalar_lea.sflag [#allocation6], 1
    %29 = vsyncpa %s28, 0
    %30 = vsyncpa [#allocation9], 0
    %s31 = scalar_lea.sflag [#allocation9], 1
    %32 = vsyncpa %s31, 0
    %33 = vsyncpa [#allocation4], 0
    loop: start=0, step=1, limit=4
    $region2: #{tpu_custom_call.1} parent=1 // loop_pre_header
      _
    $region3: #{tpu_custom_call.1} parent=1 // loop_header
      %s35 = sphi 0, %s39
      %p36 = scmp.ge.s32.totalorder %s35, 4
      %s42 = sphi 0, %s54
      %s43 = sphi 0, %s50
      %s44 = sphi 0, %s42
      %s45 = sphi 0, %s43
      %s46 = sphi 0, %s44
      %s47 = sphi 0, %s45
      %s57 = sphi 0, %s59
      %s60 = sphi 0, %s57
      %s61 = sphi 0, %s60
      %s77 = sphi 0, %s61
      %s83 = sphi 0, %s85
      %s86 = sphi 0, %s83
      %s87 = sphi 0, %s86
      %s103 = sphi 0, %s87
      %s109 = sphi 0, %s111
      %s112 = sphi 0, %s109
      %s113 = sphi 0, %s112
      %s129 = sphi 0, %s113
      %s135 = sphi 0, %s137
      %s138 = sphi 0, %s135
      %s139 = sphi 0, %s138
      %s155 = sphi 0, %s139
      %s161 = sphi 0, %s163
      %s164 = sphi 0, %s161
      %s165 = sphi 0, %s164
      %s181 = sphi 0, %s165
      %s187 = sphi 0, %s189
      %s190 = sphi 0, %s187
      %s191 = sphi 0, %s190
      %s207 = sphi 0, %s191
      %s213 = sphi 0, %s215
      %s216 = sphi 0, %s213
      %s217 = sphi 0, %s216
      %s233 = sphi 0, %s217
      %s239 = sphi 0, %s241
      %s242 = sphi 0, %s239
      %s243 = sphi 0, %s242
      %s259 = sphi 0, %s243
      %s265 = sphi 0, %s267
      %s268 = sphi 0, %s265
      %s269 = sphi 0, %s268
      %s285 = sphi 0, %s269
      %s291 = sphi 0, %s293
      %s294 = sphi 0, %s291
      %s295 = sphi 0, %s294
      %s311 = sphi 0, %s295
      %s317 = sphi 0, %s319
      %s320 = sphi 0, %s317
      %s321 = sphi 0, %s320
      %s337 = sphi 0, %s321
      %s343 = sphi 0, %s345
      %s346 = sphi 0, %s343
      %s347 = sphi 0, %s346
      %s363 = sphi 0, %s347
      %s369 = sphi 0, %s371
      %s372 = sphi 0, %s369
      %s373 = sphi 0, %s372
      %s389 = sphi 0, %s373
      %s395 = sphi 0, %s397
      %s398 = sphi 0, %s395
      %s399 = sphi 0, %s398
      %s415 = sphi 0, %s399
      %s421 = sphi 0, %s423
      %s424 = sphi 0, %s421
      %s425 = sphi 0, %s424
      %s441 = sphi 0, %s425
      %s447 = sphi 0, %s449
      %s450 = sphi 0, %s447
      %s451 = sphi 0, %s450
      %s467 = sphi 0, %s451
      %s473 = sphi 0, %s475
      %s476 = sphi 0, %s473
      %s477 = sphi 0, %s476
      %s493 = sphi 0, %s477
      %s499 = sphi 0, %s501
      %s502 = sphi 0, %s499
      %s503 = sphi 0, %s502
      %s519 = sphi 0, %s503
      %s525 = sphi 0, %s527
      %s528 = sphi 0, %s525
      %s529 = sphi 0, %s528
      %s545 = sphi 0, %s529
      %s551 = sphi 0, %s553
      %s554 = sphi 0, %s551
      %s555 = sphi 0, %s554
      %s571 = sphi 0, %s555
    $region4: #{tpu_custom_call.1} parent=1 // loop_header_branch
      %38 = sbr.rel (%p36) target = $region8
    $region5: #{tpu_custom_call.1} parent=1 // loop_body
      %s40 = ssub.s32 %s35, 1
      %s41 = ssub.s32 %s35, 2
      %s48 = sadd.s32 1, %s43
      %p49 = scmp.ge.s32.totalorder %s48, 2
      %s50 = scalar_select %p49, 0, %s48
      %s51 = sadd.s32 1, %s42
      %s52 = scalar_select %p49, %s51, %s42
      %p53 = scmp.ge.s32.totalorder %s52, 1
      %s54 = scalar_select %p53, 0, %s52
      %s55 = ssub.s32 %s42, %s54
      %p56 = scmp.eq.s32.totalorder %s55, 0
      %s58 = sadd.s32 %s57, 1
      %s59 = scalar_select %p56, %s57, %s58
      %p62 = pneg %p56
      %p63 = scmp.eq.s32.totalorder %s35, 1
      %p64 = por %p62, %p63
      %p65 = scmp.ne.s32.totalorder %s57, %s60
      %p66 = scmp.eq.s32.totalorder %s35, 0
      %p67 = por %p65, %p66
      %p68 = scmp.ne.s32.totalorder %s57, %s60
      %p69 = scmp.eq.s32.totalorder %s40, 1
      %p70 = por %p68, %p69
      %p71 = scmp.ne.s32.totalorder %s60, %s61
      %p72 = scmp.eq.s32.totalorder %s40, 0
      %p73 = por %p71, %p72
      %p74 = scmp.ne.s32.totalorder %s60, %s61
      %p75 = scmp.eq.s32.totalorder %s41, 1
      %p76 = por %p74, %p75
      %p78 = scmp.ne.s32.totalorder %s61, %s77
      %p79 = scmp.eq.s32.totalorder %s41, 0
      %p80 = por %p78, %p79
      %s81 = ssub.s32 %s42, %s54
      %p82 = scmp.eq.s32.totalorder %s81, 0
      %s84 = sadd.s32 %s83, 1
      %s85 = scalar_select %p82, %s83, %s84
      %p88 = pneg %p82
      %p89 = scmp.eq.s32.totalorder %s35, 1
      %p90 = por %p88, %p89
      %p91 = scmp.ne.s32.totalorder %s83, %s86
      %p92 = scmp.eq.s32.totalorder %s35, 0
      %p93 = por %p91, %p92
      %p94 = scmp.ne.s32.totalorder %s83, %s86
      %p95 = scmp.eq.s32.totalorder %s40, 1
      %p96 = por %p94, %p95
      %p97 = scmp.ne.s32.totalorder %s86, %s87
      %p98 = scmp.eq.s32.totalorder %s40, 0
      %p99 = por %p97, %p98
      %p100 = scmp.ne.s32.totalorder %s86, %s87
      %p101 = scmp.eq.s32.totalorder %s41, 1
      %p102 = por %p100, %p101
      %p104 = scmp.ne.s32.totalorder %s87, %s103
      %p105 = scmp.eq.s32.totalorder %s41, 0
      %p106 = por %p104, %p105
      %s107 = ssub.s32 %s42, %s54
      %p108 = scmp.eq.s32.totalorder %s107, 0
      %s110 = sadd.s32 %s109, 1
      %s111 = scalar_select %p108, %s109, %s110
      %p114 = pneg %p108
      %p115 = scmp.eq.s32.totalorder %s35, 1
      %p116 = por %p114, %p115
      %p117 = scmp.ne.s32.totalorder %s109, %s112
      %p118 = scmp.eq.s32.totalorder %s35, 0
      %p119 = por %p117, %p118
      %p120 = scmp.ne.s32.totalorder %s109, %s112
      %p121 = scmp.eq.s32.totalorder %s40, 1
      %p122 = por %p120, %p121
      %p123 = scmp.ne.s32.totalorder %s112, %s113
      %p124 = scmp.eq.s32.totalorder %s40, 0
      %p125 = por %p123, %p124
      %p126 = scmp.ne.s32.totalorder %s112, %s113
      %p127 = scmp.eq.s32.totalorder %s41, 1
      %p128 = por %p126, %p127
      %p130 = scmp.ne.s32.totalorder %s113, %s129
      %p131 = scmp.eq.s32.totalorder %s41, 0
      %p132 = por %p130, %p131
      %s133 = ssub.s32 %s43, %s50
      %p134 = scmp.eq.s32.totalorder %s133, 0
      %s136 = sadd.s32 %s135, 1
      %s137 = scalar_select %p134, %s135, %s136
      %p140 = pneg %p134
      %p141 = scmp.eq.s32.totalorder %s35, 1
      %p142 = por %p140, %p141
      %p143 = scmp.ne.s32.totalorder %s135, %s138
      %p144 = scmp.eq.s32.totalorder %s35, 0
      %p145 = por %p143, %p144
      %p146 = scmp.ne.s32.totalorder %s135, %s138
      %p147 = scmp.eq.s32.totalorder %s40, 1
      %p148 = por %p146, %p147
      %p149 = scmp.ne.s32.totalorder %s138, %s139
      %p150 = scmp.eq.s32.totalorder %s40, 0
      %p151 = por %p149, %p150
      %p152 = scmp.ne.s32.totalorder %s138, %s139
      %p153 = scmp.eq.s32.totalorder %s41, 1
      %p154 = por %p152, %p153
      %p156 = scmp.ne.s32.totalorder %s139, %s155
      %p157 = scmp.eq.s32.totalorder %s41, 0
      %p158 = por %p156, %p157
      %s159 = ssub.s32 %s43, %s50
      %p160 = scmp.eq.s32.totalorder %s159, 0
      %s162 = sadd.s32 %s161, 1
      %s163 = scalar_select %p160, %s161, %s162
      %p166 = pneg %p160
      %p167 = scmp.eq.s32.totalorder %s35, 1
      %p168 = por %p166, %p167
      %p169 = scmp.ne.s32.totalorder %s161, %s164
      %p170 = scmp.eq.s32.totalorder %s35, 0
      %p171 = por %p169, %p170
      %p172 = scmp.ne.s32.totalorder %s161, %s164
      %p173 = scmp.eq.s32.totalorder %s40, 1
      %p174 = por %p172, %p173
      %p175 = scmp.ne.s32.totalorder %s164, %s165
      %p176 = scmp.eq.s32.totalorder %s40, 0
      %p177 = por %p175, %p176
      %p178 = scmp.ne.s32.totalorder %s164, %s165
      %p179 = scmp.eq.s32.totalorder %s41, 1
      %p180 = por %p178, %p179
      %p182 = scmp.ne.s32.totalorder %s165, %s181
      %p183 = scmp.eq.s32.totalorder %s41, 0
      %p184 = por %p182, %p183
      %s185 = ssub.s32 %s43, %s50
      %p186 = scmp.eq.s32.totalorder %s185, 0
      %s188 = sadd.s32 %s187, 1
      %s189 = scalar_select %p186, %s187, %s188
      %p192 = pneg %p186
      %p193 = scmp.eq.s32.totalorder %s35, 1
      %p194 = por %p192, %p193
      %p195 = scmp.ne.s32.totalorder %s187, %s190
      %p196 = scmp.eq.s32.totalorder %s35, 0
      %p197 = por %p195, %p196
      %p198 = scmp.ne.s32.totalorder %s187, %s190
      %p199 = scmp.eq.s32.totalorder %s40, 1
      %p200 = por %p198, %p199
      %p201 = scmp.ne.s32.totalorder %s190, %s191
      %p202 = scmp.eq.s32.totalorder %s40, 0
      %p203 = por %p201, %p202
      %p204 = scmp.ne.s32.totalorder %s190, %s191
      %p205 = scmp.eq.s32.totalorder %s41, 1
      %p206 = por %p204, %p205
      %p208 = scmp.ne.s32.totalorder %s191, %s207
      %p209 = scmp.eq.s32.totalorder %s41, 0
      %p210 = por %p208, %p209
      %s211 = ssub.s32 %s43, %s50
      %p212 = scmp.eq.s32.totalorder %s211, 0
      %s214 = sadd.s32 %s213, 1
      %s215 = scalar_select %p212, %s213, %s214
      %p218 = pneg %p212
      %p219 = scmp.eq.s32.totalorder %s35, 1
      %p220 = por %p218, %p219
      %p221 = scmp.ne.s32.totalorder %s213, %s216
      %p222 = scmp.eq.s32.totalorder %s35, 0
      %p223 = por %p221, %p222
      %p224 = scmp.ne.s32.totalorder %s213, %s216
      %p225 = scmp.eq.s32.totalorder %s40, 1
      %p226 = por %p224, %p225
      %p227 = scmp.ne.s32.totalorder %s216, %s217
      %p228 = scmp.eq.s32.totalorder %s40, 0
      %p229 = por %p227, %p228
      %p230 = scmp.ne.s32.totalorder %s216, %s217
      %p231 = scmp.eq.s32.totalorder %s41, 1
      %p232 = por %p230, %p231
      %p234 = scmp.ne.s32.totalorder %s217, %s233
      %p235 = scmp.eq.s32.totalorder %s41, 0
      %p236 = por %p234, %p235
      %s237 = ssub.s32 %s43, %s50
      %p238 = scmp.eq.s32.totalorder %s237, 0
      %s240 = sadd.s32 %s239, 1
      %s241 = scalar_select %p238, %s239, %s240
      %p244 = pneg %p238
      %p245 = scmp.eq.s32.totalorder %s35, 1
      %p246 = por %p244, %p245
      %p247 = scmp.ne.s32.totalorder %s239, %s242
      %p248 = scmp.eq.s32.totalorder %s35, 0
      %p249 = por %p247, %p248
      %p250 = scmp.ne.s32.totalorder %s239, %s242
      %p251 = scmp.eq.s32.totalorder %s40, 1
      %p252 = por %p250, %p251
      %p253 = scmp.ne.s32.totalorder %s242, %s243
      %p254 = scmp.eq.s32.totalorder %s40, 0
      %p255 = por %p253, %p254
      %p256 = scmp.ne.s32.totalorder %s242, %s243
      %p257 = scmp.eq.s32.totalorder %s41, 1
      %p258 = por %p256, %p257
      %p260 = scmp.ne.s32.totalorder %s243, %s259
      %p261 = scmp.eq.s32.totalorder %s41, 0
      %p262 = por %p260, %p261
      %s263 = ssub.s32 %s43, %s50
      %p264 = scmp.eq.s32.totalorder %s263, 0
      %s266 = sadd.s32 %s265, 1
      %s267 = scalar_select %p264, %s265, %s266
      %p270 = pneg %p264
      %p271 = scmp.eq.s32.totalorder %s35, 1
      %p272 = por %p270, %p271
      %p273 = scmp.ne.s32.totalorder %s265, %s268
      %p274 = scmp.eq.s32.totalorder %s35, 0
      %p275 = por %p273, %p274
      %p276 = scmp.ne.s32.totalorder %s265, %s268
      %p277 = scmp.eq.s32.totalorder %s40, 1
      %p278 = por %p276, %p277
      %p279 = scmp.ne.s32.totalorder %s268, %s269
      %p280 = scmp.eq.s32.totalorder %s40, 0
      %p281 = por %p279, %p280
      %p282 = scmp.ne.s32.totalorder %s268, %s269
      %p283 = scmp.eq.s32.totalorder %s41, 1
      %p284 = por %p282, %p283
      %p286 = scmp.ne.s32.totalorder %s269, %s285
      %p287 = scmp.eq.s32.totalorder %s41, 0
      %p288 = por %p286, %p287
      %s289 = ssub.s32 %s43, %s50
      %p290 = scmp.eq.s32.totalorder %s289, 0
      %s292 = sadd.s32 %s291, 1
      %s293 = scalar_select %p290, %s291, %s292
      %p296 = pneg %p290
      %p297 = scmp.eq.s32.totalorder %s35, 1
      %p298 = por %p296, %p297
      %p299 = scmp.ne.s32.totalorder %s291, %s294
      %p300 = scmp.eq.s32.totalorder %s35, 0
      %p301 = por %p299, %p300
      %p302 = scmp.ne.s32.totalorder %s291, %s294
      %p303 = scmp.eq.s32.totalorder %s40, 1
      %p304 = por %p302, %p303
      %p305 = scmp.ne.s32.totalorder %s294, %s295
      %p306 = scmp.eq.s32.totalorder %s40, 0
      %p307 = por %p305, %p306
      %p308 = scmp.ne.s32.totalorder %s294, %s295
      %p309 = scmp.eq.s32.totalorder %s41, 1
      %p310 = por %p308, %p309
      %p312 = scmp.ne.s32.totalorder %s295, %s311
      %p313 = scmp.eq.s32.totalorder %s41, 0
      %p314 = por %p312, %p313
      %s315 = ssub.s32 %s43, %s50
      %p316 = scmp.eq.s32.totalorder %s315, 0
      %s318 = sadd.s32 %s317, 1
      %s319 = scalar_select %p316, %s317, %s318
      %p322 = pneg %p316
      %p323 = scmp.eq.s32.totalorder %s35, 1
      %p324 = por %p322, %p323
      %p325 = scmp.ne.s32.totalorder %s317, %s320
      %p326 = scmp.eq.s32.totalorder %s35, 0
      %p327 = por %p325, %p326
      %p328 = scmp.ne.s32.totalorder %s317, %s320
      %p329 = scmp.eq.s32.totalorder %s40, 1
      %p330 = por %p328, %p329
      %p331 = scmp.ne.s32.totalorder %s320, %s321
      %p332 = scmp.eq.s32.totalorder %s40, 0
      %p333 = por %p331, %p332
      %p334 = scmp.ne.s32.totalorder %s320, %s321
      %p335 = scmp.eq.s32.totalorder %s41, 1
      %p336 = por %p334, %p335
      %p338 = scmp.ne.s32.totalorder %s321, %s337
      %p339 = scmp.eq.s32.totalorder %s41, 0
      %p340 = por %p338, %p339
      %s341 = ssub.s32 %s43, %s50
      %p342 = scmp.eq.s32.totalorder %s341, 0
      %s344 = sadd.s32 %s343, 1
      %s345 = scalar_select %p342, %s343, %s344
      %p348 = pneg %p342
      %p349 = scmp.eq.s32.totalorder %s35, 1
      %p350 = por %p348, %p349
      %p351 = scmp.ne.s32.totalorder %s343, %s346
      %p352 = scmp.eq.s32.totalorder %s35, 0
      %p353 = por %p351, %p352
      %p354 = scmp.ne.s32.totalorder %s343, %s346
      %p355 = scmp.eq.s32.totalorder %s40, 1
      %p356 = por %p354, %p355
      %p357 = scmp.ne.s32.totalorder %s346, %s347
      %p358 = scmp.eq.s32.totalorder %s40, 0
      %p359 = por %p357, %p358
      %p360 = scmp.ne.s32.totalorder %s346, %s347
      %p361 = scmp.eq.s32.totalorder %s41, 1
      %p362 = por %p360, %p361
      %p364 = scmp.ne.s32.totalorder %s347, %s363
      %p365 = scmp.eq.s32.totalorder %s41, 0
      %p366 = por %p364, %p365
      %s367 = ssub.s32 %s43, %s50
      %p368 = scmp.eq.s32.totalorder %s367, 0
      %s370 = sadd.s32 %s369, 1
      %s371 = scalar_select %p368, %s369, %s370
      %p374 = pneg %p368
      %p375 = scmp.eq.s32.totalorder %s35, 1
      %p376 = por %p374, %p375
      %p377 = scmp.ne.s32.totalorder %s369, %s372
      %p378 = scmp.eq.s32.totalorder %s35, 0
      %p379 = por %p377, %p378
      %p380 = scmp.ne.s32.totalorder %s369, %s372
      %p381 = scmp.eq.s32.totalorder %s40, 1
      %p382 = por %p380, %p381
      %p383 = scmp.ne.s32.totalorder %s372, %s373
      %p384 = scmp.eq.s32.totalorder %s40, 0
      %p385 = por %p383, %p384
      %p386 = scmp.ne.s32.totalorder %s372, %s373
      %p387 = scmp.eq.s32.totalorder %s41, 1
      %p388 = por %p386, %p387
      %p390 = scmp.ne.s32.totalorder %s373, %s389
      %p391 = scmp.eq.s32.totalorder %s41, 0
      %p392 = por %p390, %p391
      %s393 = ssub.s32 %s43, %s50
      %p394 = scmp.eq.s32.totalorder %s393, 0
      %s396 = sadd.s32 %s395, 1
      %s397 = scalar_select %p394, %s395, %s396
      %p400 = pneg %p394
      %p401 = scmp.eq.s32.totalorder %s35, 1
      %p402 = por %p400, %p401
      %p403 = scmp.ne.s32.totalorder %s395, %s398
      %p404 = scmp.eq.s32.totalorder %s35, 0
      %p405 = por %p403, %p404
      %p406 = scmp.ne.s32.totalorder %s395, %s398
      %p407 = scmp.eq.s32.totalorder %s40, 1
      %p408 = por %p406, %p407
      %p409 = scmp.ne.s32.totalorder %s398, %s399
      %p410 = scmp.eq.s32.totalorder %s40, 0
      %p411 = por %p409, %p410
      %p412 = scmp.ne.s32.totalorder %s398, %s399
      %p413 = scmp.eq.s32.totalorder %s41, 1
      %p414 = por %p412, %p413
      %p416 = scmp.ne.s32.totalorder %s399, %s415
      %p417 = scmp.eq.s32.totalorder %s41, 0
      %p418 = por %p416, %p417
      %s419 = ssub.s32 %s43, %s50
      %p420 = scmp.eq.s32.totalorder %s419, 0
      %s422 = sadd.s32 %s421, 1
      %s423 = scalar_select %p420, %s421, %s422
      %p426 = pneg %p420
      %p427 = scmp.eq.s32.totalorder %s35, 1
      %p428 = por %p426, %p427
      %p429 = scmp.ne.s32.totalorder %s421, %s424
      %p430 = scmp.eq.s32.totalorder %s35, 0
      %p431 = por %p429, %p430
      %p432 = scmp.ne.s32.totalorder %s421, %s424
      %p433 = scmp.eq.s32.totalorder %s40, 1
      %p434 = por %p432, %p433
      %p435 = scmp.ne.s32.totalorder %s424, %s425
      %p436 = scmp.eq.s32.totalorder %s40, 0
      %p437 = por %p435, %p436
      %p438 = scmp.ne.s32.totalorder %s424, %s425
      %p439 = scmp.eq.s32.totalorder %s41, 1
      %p440 = por %p438, %p439
      %p442 = scmp.ne.s32.totalorder %s425, %s441
      %p443 = scmp.eq.s32.totalorder %s41, 0
      %p444 = por %p442, %p443
      %s445 = ssub.s32 %s43, %s50
      %p446 = scmp.eq.s32.totalorder %s445, 0
      %s448 = sadd.s32 %s447, 1
      %s449 = scalar_select %p446, %s447, %s448
      %p452 = pneg %p446
      %p453 = scmp.eq.s32.totalorder %s35, 1
      %p454 = por %p452, %p453
      %p455 = scmp.ne.s32.totalorder %s447, %s450
      %p456 = scmp.eq.s32.totalorder %s35, 0
      %p457 = por %p455, %p456
      %p458 = scmp.ne.s32.totalorder %s447, %s450
      %p459 = scmp.eq.s32.totalorder %s40, 1
      %p460 = por %p458, %p459
      %p461 = scmp.ne.s32.totalorder %s450, %s451
      %p462 = scmp.eq.s32.totalorder %s40, 0
      %p463 = por %p461, %p462
      %p464 = scmp.ne.s32.totalorder %s450, %s451
      %p465 = scmp.eq.s32.totalorder %s41, 1
      %p466 = por %p464, %p465
      %p468 = scmp.ne.s32.totalorder %s451, %s467
      %p469 = scmp.eq.s32.totalorder %s41, 0
      %p470 = por %p468, %p469
      %s471 = ssub.s32 %s43, %s50
      %p472 = scmp.eq.s32.totalorder %s471, 0
      %s474 = sadd.s32 %s473, 1
      %s475 = scalar_select %p472, %s473, %s474
      %p478 = pneg %p472
      %p479 = scmp.eq.s32.totalorder %s35, 1
      %p480 = por %p478, %p479
      %p481 = scmp.ne.s32.totalorder %s473, %s476
      %p482 = scmp.eq.s32.totalorder %s35, 0
      %p483 = por %p481, %p482
      %p484 = scmp.ne.s32.totalorder %s473, %s476
      %p485 = scmp.eq.s32.totalorder %s40, 1
      %p486 = por %p484, %p485
      %p487 = scmp.ne.s32.totalorder %s476, %s477
      %p488 = scmp.eq.s32.totalorder %s40, 0
      %p489 = por %p487, %p488
      %p490 = scmp.ne.s32.totalorder %s476, %s477
      %p491 = scmp.eq.s32.totalorder %s41, 1
      %p492 = por %p490, %p491
      %p494 = scmp.ne.s32.totalorder %s477, %s493
      %p495 = scmp.eq.s32.totalorder %s41, 0
      %p496 = por %p494, %p495
      %s497 = ssub.s32 %s43, %s50
      %p498 = scmp.eq.s32.totalorder %s497, 0
      %s500 = sadd.s32 %s499, 1
      %s501 = scalar_select %p498, %s499, %s500
      %p504 = pneg %p498
      %p505 = scmp.eq.s32.totalorder %s35, 1
      %p506 = por %p504, %p505
      %p507 = scmp.ne.s32.totalorder %s499, %s502
      %p508 = scmp.eq.s32.totalorder %s35, 0
      %p509 = por %p507, %p508
      %p510 = scmp.ne.s32.totalorder %s499, %s502
      %p511 = scmp.eq.s32.totalorder %s40, 1
      %p512 = por %p510, %p511
      %p513 = scmp.ne.s32.totalorder %s502, %s503
      %p514 = scmp.eq.s32.totalorder %s40, 0
      %p515 = por %p513, %p514
      %p516 = scmp.ne.s32.totalorder %s502, %s503
      %p517 = scmp.eq.s32.totalorder %s41, 1
      %p518 = por %p516, %p517
      %p520 = scmp.ne.s32.totalorder %s503, %s519
      %p521 = scmp.eq.s32.totalorder %s41, 0
      %p522 = por %p520, %p521
      %s523 = ssub.s32 %s43, %s50
      %p524 = scmp.eq.s32.totalorder %s523, 0
      %s526 = sadd.s32 %s525, 1
      %s527 = scalar_select %p524, %s525, %s526
      %p530 = pneg %p524
      %p531 = scmp.eq.s32.totalorder %s35, 1
      %p532 = por %p530, %p531
      %p533 = scmp.ne.s32.totalorder %s525, %s528
      %p534 = scmp.eq.s32.totalorder %s35, 0
      %p535 = por %p533, %p534
      %p536 = scmp.ne.s32.totalorder %s525, %s528
      %p537 = scmp.eq.s32.totalorder %s40, 1
      %p538 = por %p536, %p537
      %p539 = scmp.ne.s32.totalorder %s528, %s529
      %p540 = scmp.eq.s32.totalorder %s40, 0
      %p541 = por %p539, %p540
      %p542 = scmp.ne.s32.totalorder %s528, %s529
      %p543 = scmp.eq.s32.totalorder %s41, 1
      %p544 = por %p542, %p543
      %p546 = scmp.ne.s32.totalorder %s529, %s545
      %p547 = scmp.eq.s32.totalorder %s41, 0
      %p548 = por %p546, %p547
      %s549 = ssub.s32 %s42, %s54
      %p550 = scmp.eq.s32.totalorder %s549, 0
      %s552 = sadd.s32 %s551, 1
      %s553 = scalar_select %p550, %s551, %s552
      %p556 = pneg %p550
      %p557 = scmp.eq.s32.totalorder %s35, 1
      %p558 = por %p556, %p557
      %p559 = scmp.ne.s32.totalorder %s551, %s554
      %p560 = scmp.eq.s32.totalorder %s35, 0
      %p561 = por %p559, %p560
      %p562 = scmp.ne.s32.totalorder %s551, %s554
      %p563 = scmp.eq.s32.totalorder %s40, 1
      %p564 = por %p562, %p563
      %p565 = scmp.ne.s32.totalorder %s554, %s555
      %p566 = scmp.eq.s32.totalorder %s40, 0
      %p567 = por %p565, %p566
      %p568 = scmp.ne.s32.totalorder %s554, %s555
      %p569 = scmp.eq.s32.totalorder %s41, 1
      %p570 = por %p568, %p569
      %p572 = scmp.ne.s32.totalorder %s555, %s571
      %p573 = scmp.eq.s32.totalorder %s41, 0
      %p574 = por %p572, %p573
      %p575 = scmp.le.s32.totalorder 1, %s35
      %p576 = scmp.lt.s32.totalorder %s35, 3
      %p577 = pnand %p575, %p576
      %p578 = pneg %p577
      // Predicated region
      $region9: #{tpu_custom_call.1} parent=5 // pred_check
        _
      $region10: #{tpu_custom_call.1} parent=5 // pred_check_branch
        %580 = sbr.rel (%p577) target = $region12
      $region11: #{tpu_custom_call.1} parent=5 // pred_region
        %s581 = ssub.s32 %s35, 1
        // Predicated region
        $region13: #{tpu_custom_call.1} parent=11 // pred_check
          %p582 = pneg %p73
        $region14: #{tpu_custom_call.1} parent=11 // pred_check_branch
          %584 = sbr.rel (%p582) target = $region16
        $region15: #{tpu_custom_call.1} parent=11 // pred_region
          %s585 = smul.u32 2, %s44
          %p586 = scmp.lt.s32.totalorder %s585, 1
          %s587 = scalar_select %p586, %s585, 1
          %s588 = smul.addr %s587, 8
          %s589 = scalar_lea.vmem %s0, %s588
          %s590 = smul.u32 2, %s44
        $region16: #{tpu_custom_call.1} parent=11 // pred_fallthru
          _
        // Predicated region
        $region17: #{tpu_custom_call.1} parent=11 // pred_check
          %p591 = pneg %p99
        $region18: #{tpu_custom_call.1} parent=11 // pred_check_branch
          %593 = sbr.rel (%p591) target = $region20
        $region19: #{tpu_custom_call.1} parent=11 // pred_region
          %s594 = smul.u32 2, %s44
          %p595 = scmp.lt.s32.totalorder %s594, 1
          %s596 = scalar_select %p595, %s594, 1
          %s597 = smul.addr %s596, 8
          %s598 = scalar_lea.vmem %s1, %s597
          %s599 = smul.u32 2, %s44
        $region20: #{tpu_custom_call.1} parent=11 // pred_fallthru
          _
        // Predicated region
        $region21: #{tpu_custom_call.1} parent=11 // pred_check
          %p600 = pneg %p125
        $region22: #{tpu_custom_call.1} parent=11 // pred_check_branch
          %602 = sbr.rel (%p600) target = $region24
        $region23: #{tpu_custom_call.1} parent=11 // pred_region
          %s603 = smul.u32 2, %s44
          %p604 = scmp.lt.s32.totalorder %s603, 1
          %s605 = scalar_select %p604, %s603, 1
          %s606 = scalar_lea.vmem %s2, %s605
          %s607 = smul.u32 2, %s44
        $region24: #{tpu_custom_call.1} parent=11 // pred_fallthru
          _
      $region12: #{tpu_custom_call.1} parent=5 // pred_fallthru
        _
      %p608 = scmp.lt.s32.totalorder %s35, 2
      // Predicated region
      $region25: #{tpu_custom_call.1} parent=5 // pred_check
        %p609 = pneg %p608
      $region26: #{tpu_custom_call.1} parent=5 // pred_check_branch
        %611 = sbr.rel (%p609) target = $region28
      $region27: #{tpu_custom_call.1} parent=5 // pred_region
        // Predicated region
        $region29: #{tpu_custom_call.1} parent=27 // pred_check
          %p612 = pneg %p145
        $region30: #{tpu_custom_call.1} parent=27 // pred_check_branch
          %614 = sbr.rel (%p612) target = $region32
        $region31: #{tpu_custom_call.1} parent=27 // pred_region
          %p615 = scmp.lt.s32.totalorder %s43, 1
          %s616 = scalar_select %p615, %s43, 1
          %s617 = smul.addr %s616, 4
          %s618 = smul.addr %s617, 8
          %s619 = scalar_lea.vmem %s3, %s618
        $region32: #{tpu_custom_call.1} parent=27 // pred_fallthru
          _
        // Predicated region
        $region33: #{tpu_custom_call.1} parent=27 // pred_check
          %p620 = pneg %p171
        $region34: #{tpu_custom_call.1} parent=27 // pred_check_branch
          %622 = sbr.rel (%p620) target = $region36
        $region35: #{tpu_custom_call.1} parent=27 // pred_region
          %p623 = scmp.lt.s32.totalorder %s43, 1
          %s624 = scalar_select %p623, %s43, 1
          %s625 = scalar_lea.vmem %s4, %s624
        $region36: #{tpu_custom_call.1} parent=27 // pred_fallthru
          _
        // Predicated region
        $region37: #{tpu_custom_call.1} parent=27 // pred_check
          %p626 = pneg %p197
        $region38: #{tpu_custom_call.1} parent=27 // pred_check_branch
          %628 = sbr.rel (%p626) target = $region40
        $region39: #{tpu_custom_call.1} parent=27 // pred_region
          %p629 = scmp.lt.s32.totalorder %s43, 1
          %s630 = scalar_select %p629, %s43, 1
          %s631 = smul.addr %s630, 4
          %s632 = smul.addr %s631, 8
          %s633 = scalar_lea.vmem %s5, %s632
        $region40: #{tpu_custom_call.1} parent=27 // pred_fallthru
          _
        // Predicated region
        $region41: #{tpu_custom_call.1} parent=27 // pred_check
          %p634 = pneg %p223
        $region42: #{tpu_custom_call.1} parent=27 // pred_check_branch
          %636 = sbr.rel (%p634) target = $region44
        $region43: #{tpu_custom_call.1} parent=27 // pred_region
          %p637 = scmp.lt.s32.totalorder %s43, 1
          %s638 = scalar_select %p637, %s43, 1
          %s639 = scalar_lea.vmem %s6, %s638
        $region44: #{tpu_custom_call.1} parent=27 // pred_fallthru
          _
        // Predicated region
        $region45: #{tpu_custom_call.1} parent=27 // pred_check
          %p640 = pneg %p249
        $region46: #{tpu_custom_call.1} parent=27 // pred_check_branch
          %642 = sbr.rel (%p640) target = $region48
        $region47: #{tpu_custom_call.1} parent=27 // pred_region
          %p643 = scmp.lt.s32.totalorder %s43, 1
          %s644 = scalar_select %p643, %s43, 1
          %s645 = smul.addr %s644, 4
          %s646 = smul.addr %s645, 8
          %s647 = scalar_lea.vmem %s7, %s646
        $region48: #{tpu_custom_call.1} parent=27 // pred_fallthru
          _
        // Predicated region
        $region49: #{tpu_custom_call.1} parent=27 // pred_check
          %p648 = pneg %p275
        $region50: #{tpu_custom_call.1} parent=27 // pred_check_branch
          %650 = sbr.rel (%p648) target = $region52
        $region51: #{tpu_custom_call.1} parent=27 // pred_region
          %s651 = sand.u32 %s265, 1
          %s652 = scalar_lea.sflag [#allocation3], %s651
          %s653 = sand.u32 %s265, 1
          %s654 = scalar_lea.vmem [#allocation2], %s653
          %656 = vsyncadd %s652, 0
          %s657 = scalar_lea.hbm %s8, %s43
          %s659 = sshll.u32 %s657, 4
          %s660 = int_to_ptr.hbm [resolvable:$true] %s659
          %s661 = sshll.u32 %s654, 4
          %s662 = int_to_ptr.vmem [resolvable:$true] %s661
          %664 = dma.hbm_to_vmem [thread:$0]  %s660, 16, %s662, %s652
        $region52: #{tpu_custom_call.1} parent=27 // pred_fallthru
          _
        // Predicated region
        $region53: #{tpu_custom_call.1} parent=27 // pred_check
          %p665 = pneg %p301
        $region54: #{tpu_custom_call.1} parent=27 // pred_check_branch
          %667 = sbr.rel (%p665) target = $region56
        $region55: #{tpu_custom_call.1} parent=27 // pred_region
          %s668 = sand.u32 %s35, 1
          %s669 = scalar_lea.sflag [#allocation6], %s668
          %s670 = sand.u32 %s291, 1
          %s671 = smul.addr %s670, 32
          %s672 = scalar_lea.vmem [#allocation5], %s671
          %674 = vsyncadd %s669, 0
          %s675 = smul.addr %s43, 4
          %s676 = smul.addr %s675, 8
          %s677 = scalar_lea.hbm %s9, %s676
          %s678 = sshll.u32 %s677, 4
          %s679 = int_to_ptr.hbm [resolvable:$true] %s678
          %s680 = sshll.u32 %s672, 4
          %s681 = int_to_ptr.vmem [resolvable:$true] %s680
          %686 = dma.hbm_to_vmem [thread:$0]  %s679, 512, %s681, %s669, 128, 128, 8
        $region56: #{tpu_custom_call.1} parent=27 // pred_fallthru
          _
        // Predicated region
        $region57: #{tpu_custom_call.1} parent=27 // pred_check
          %p687 = pneg %p327
        $region58: #{tpu_custom_call.1} parent=27 // pred_check_branch
          %689 = sbr.rel (%p687) target = $region60
        $region59: #{tpu_custom_call.1} parent=27 // pred_region
          %p690 = scmp.lt.s32.totalorder %s43, 1
          %s691 = scalar_select %p690, %s43, 1
          %s692 = scalar_lea.vmem %s10, %s691
        $region60: #{tpu_custom_call.1} parent=27 // pred_fallthru
          _
        // Predicated region
        $region61: #{tpu_custom_call.1} parent=27 // pred_check
          %p693 = pneg %p353
        $region62: #{tpu_custom_call.1} parent=27 // pred_check_branch
          %695 = sbr.rel (%p693) target = $region64
        $region63: #{tpu_custom_call.1} parent=27 // pred_region
          %p696 = scmp.lt.s32.totalorder %s43, 1
          %s697 = scalar_select %p696, %s43, 1
          %s698 = scalar_lea.vmem %s11, %s697
        $region64: #{tpu_custom_call.1} parent=27 // pred_fallthru
          _
        // Predicated region
        $region65: #{tpu_custom_call.1} parent=27 // pred_check
          %p699 = pneg %p379
        $region66: #{tpu_custom_call.1} parent=27 // pred_check_branch
          %701 = sbr.rel (%p699) target = $region68
        $region67: #{tpu_custom_call.1} parent=27 // pred_region
          %p702 = scmp.lt.s32.totalorder %s43, 1
          %s703 = scalar_select %p702, %s43, 1
          %s704 = scalar_lea.vmem %s12, %s703
        $region68: #{tpu_custom_call.1} parent=27 // pred_fallthru
          _
        // Predicated region
        $region69: #{tpu_custom_call.1} parent=27 // pred_check
          %p705 = pneg %p405
        $region70: #{tpu_custom_call.1} parent=27 // pred_check_branch
          %707 = sbr.rel (%p705) target = $region72
        $region71: #{tpu_custom_call.1} parent=27 // pred_region
          %s708 = sand.u32 %s35, 1
          %s709 = scalar_lea.sflag [#allocation6], %s708
          %s710 = sand.u32 %s395, 1
          %s711 = smul.addr %s710, 288
          %s712 = scalar_lea.vmem [#allocation7], %s711
          %714 = vsyncadd %s709, 0
          %s715 = smul.addr %s43, 36
          %s716 = smul.addr %s715, 8
          %s717 = scalar_lea.hbm %s13, %s716
          %s718 = sshll.u32 %s717, 4
          %s719 = int_to_ptr.hbm [resolvable:$true] %s718
          %s720 = sshll.u32 %s712, 4
          %s721 = int_to_ptr.vmem [resolvable:$true] %s720
          %726 = dma.hbm_to_vmem [thread:$0]  %s719, 4608, %s721, %s709, 128, 128, 8
        $region72: #{tpu_custom_call.1} parent=27 // pred_fallthru
          _
        // Predicated region
        $region73: #{tpu_custom_call.1} parent=27 // pred_check
          %p727 = pneg %p431
        $region74: #{tpu_custom_call.1} parent=27 // pred_check_branch
          %729 = sbr.rel (%p727) target = $region76
        $region75: #{tpu_custom_call.1} parent=27 // pred_region
          %s730 = sand.u32 %s421, 1
          %s731 = scalar_lea.sflag [#allocation9], %s730
          %s732 = sand.u32 %s421, 1
          %s733 = scalar_lea.vmem [#allocation8], %s732
          %735 = vsyncadd %s731, 0
          %s736 = scalar_lea.hbm %s14, %s43
          %s738 = sshll.u32 %s736, 4
          %s739 = int_to_ptr.hbm [resolvable:$true] %s738
          %s740 = sshll.u32 %s733, 4
          %s741 = int_to_ptr.vmem [resolvable:$true] %s740
          %743 = dma.hbm_to_vmem [thread:$0]  %s739, 16, %s741, %s731
        $region76: #{tpu_custom_call.1} parent=27 // pred_fallthru
          _
        // Predicated region
        $region77: #{tpu_custom_call.1} parent=27 // pred_check
          %p744 = pneg %p457
        $region78: #{tpu_custom_call.1} parent=27 // pred_check_branch
          %746 = sbr.rel (%p744) target = $region80
        $region79: #{tpu_custom_call.1} parent=27 // pred_region
          %p747 = scmp.lt.s32.totalorder %s43, 1
          %s748 = scalar_select %p747, %s43, 1
          %s749 = smul.addr %s748, 8
          %s750 = smul.addr %s749, 8
          %s751 = scalar_lea.vmem %s15, %s750
        $region80: #{tpu_custom_call.1} parent=27 // pred_fallthru
          _
        // Predicated region
        $region81: #{tpu_custom_call.1} parent=27 // pred_check
          %p752 = pneg %p483
        $region82: #{tpu_custom_call.1} parent=27 // pred_check_branch
          %754 = sbr.rel (%p752) target = $region84
        $region83: #{tpu_custom_call.1} parent=27 // pred_region
          %p755 = scmp.lt.s32.totalorder %s43, 1
          %s756 = scalar_select %p755, %s43, 1
          %s757 = scalar_lea.vmem %s16, %s756
        $region84: #{tpu_custom_call.1} parent=27 // pred_fallthru
          _
        // Predicated region
        $region85: #{tpu_custom_call.1} parent=27 // pred_check
          %p758 = pneg %p509
        $region86: #{tpu_custom_call.1} parent=27 // pred_check_branch
          %760 = sbr.rel (%p758) target = $region88
        $region87: #{tpu_custom_call.1} parent=27 // pred_region
          %p761 = scmp.lt.s32.totalorder %s43, 1
          %s762 = scalar_select %p761, %s43, 1
          %s763 = scalar_lea.vmem %s17, %s762
        $region88: #{tpu_custom_call.1} parent=27 // pred_fallthru
          _
        // Predicated region
        $region89: #{tpu_custom_call.1} parent=27 // pred_check
          %p764 = pneg %p535
        $region90: #{tpu_custom_call.1} parent=27 // pred_check_branch
          %766 = sbr.rel (%p764) target = $region92
        $region91: #{tpu_custom_call.1} parent=27 // pred_region
          %p767 = scmp.lt.s32.totalorder %s43, 1
          %s768 = scalar_select %p767, %s43, 1
          %s769 = scalar_lea.vmem %s18, %s768
        $region92: #{tpu_custom_call.1} parent=27 // pred_fallthru
          _
      $region28: #{tpu_custom_call.1} parent=5 // pred_fallthru
        _
      %p770 = scmp.le.s32.totalorder 1, %s35
      %p771 = scmp.lt.s32.totalorder %s35, 3
      %p772 = pnand %p770, %p771
      %p773 = pneg %p772
      // Predicated region
      $region93: #{tpu_custom_call.1} parent=5 // pred_check
        _
      $region94: #{tpu_custom_call.1} parent=5 // pred_check_branch
        %775 = sbr.rel (%p772) target = $region96
      $region95: #{tpu_custom_call.1} parent=5 // pred_region
        %s776 = ssub.s32 %s35, 1
        %s777 = sand.u32 %s268, 1
        %s778 = scalar_lea.sflag [#allocation3], %s777
        %s779 = sand.u32 %s268, 1
        %s780 = scalar_lea.vmem [#allocation2], %s779
        // Predicated region
        $region97: #{tpu_custom_call.1} parent=95 // pred_check
          %p781 = pneg %p281
        $region98: #{tpu_custom_call.1} parent=95 // pred_check_branch
          %783 = sbr.rel (%p781) target = $region100
        $region99: #{tpu_custom_call.1} parent=95 // pred_region
          %785 = dma.done %s778, 16
        $region100: #{tpu_custom_call.1} parent=95 // pred_fallthru
          _
        %s786 = sand.u32 %s40, 1
        %s787 = scalar_lea.sflag [#allocation6], %s786
        %s788 = sand.u32 %s294, 1
        %s789 = smul.addr %s788, 32
        %s790 = scalar_lea.vmem [#allocation5], %s789
        // Predicated region
        $region101: #{tpu_custom_call.1} parent=95 // pred_check
          %p791 = pneg %p307
        $region102: #{tpu_custom_call.1} parent=95 // pred_check_branch
          %793 = sbr.rel (%p791) target = $region104
        $region103: #{tpu_custom_call.1} parent=95 // pred_region
          %795 = dma.done %s787, 512
        $region104: #{tpu_custom_call.1} parent=95 // pred_fallthru
          _
        %s796 = sand.u32 %s40, 1
        %s797 = scalar_lea.sflag [#allocation6], %s796
        %s798 = sand.u32 %s398, 1
        %s799 = smul.addr %s798, 288
        %s800 = scalar_lea.vmem [#allocation7], %s799
        // Predicated region
        $region105: #{tpu_custom_call.1} parent=95 // pred_check
          %p801 = pneg %p411
        $region106: #{tpu_custom_call.1} parent=95 // pred_check_branch
          %803 = sbr.rel (%p801) target = $region108
        $region107: #{tpu_custom_call.1} parent=95 // pred_region
          %805 = dma.done %s797, 4608
        $region108: #{tpu_custom_call.1} parent=95 // pred_fallthru
          _
        %s806 = sand.u32 %s424, 1
        %s807 = scalar_lea.sflag [#allocation9], %s806
        %s808 = sand.u32 %s424, 1
        %s809 = scalar_lea.vmem [#allocation8], %s808
        // Predicated region
        $region109: #{tpu_custom_call.1} parent=95 // pred_check
          %p810 = pneg %p437
        $region110: #{tpu_custom_call.1} parent=95 // pred_check_branch
          %812 = sbr.rel (%p810) target = $region112
        $region111: #{tpu_custom_call.1} parent=95 // pred_region
          %814 = dma.done %s807, 16
        $region112: #{tpu_custom_call.1} parent=95 // pred_fallthru
          _
        %s815 = smul.u32 2, %s44
        %p816 = scmp.lt.s32.totalorder %s815, 1
        %s817 = scalar_select %p816, %s815, 1
        %s818 = smul.addr %s817, 8
        %s819 = scalar_lea.vmem %s0, %s818
        %p820 = pneg %p73
        %p821 = pneg %p70
        %s822 = smul.u32 2, %s44
        %p823 = scmp.lt.s32.totalorder %s822, 1
        %s824 = scalar_select %p823, %s822, 1
        %s825 = smul.addr %s824, 8
        %s826 = scalar_lea.vmem %s1, %s825
        %p827 = pneg %p99
        %p828 = pneg %p96
        %s829 = smul.u32 2, %s44
        %p830 = scmp.lt.s32.totalorder %s829, 1
        %s831 = scalar_select %p830, %s829, 1
        %s832 = scalar_lea.vmem %s2, %s831
        %p833 = pneg %p125
        %p834 = pneg %p122
        %p835 = scmp.lt.s32.totalorder %s45, 1
        %s836 = scalar_select %p835, %s45, 1
        %s837 = smul.addr %s836, 4
        %s838 = smul.addr %s837, 8
        %s839 = scalar_lea.vmem %s3, %s838
        %p840 = pneg %p151
        %p841 = pneg %p148
        %p842 = scmp.lt.s32.totalorder %s45, 1
        %s843 = scalar_select %p842, %s45, 1
        %s844 = scalar_lea.vmem %s4, %s843
        %p845 = pneg %p177
        %p846 = pneg %p174
        %p847 = scmp.lt.s32.totalorder %s45, 1
        %s848 = scalar_select %p847, %s45, 1
        %s849 = smul.addr %s848, 4
        %s850 = smul.addr %s849, 8
        %s851 = scalar_lea.vmem %s5, %s850
        %p852 = pneg %p203
        %p853 = pneg %p200
        %p854 = scmp.lt.s32.totalorder %s45, 1
        %s855 = scalar_select %p854, %s45, 1
        %s856 = scalar_lea.vmem %s6, %s855
        %p857 = pneg %p229
        %p858 = pneg %p226
        %p859 = scmp.lt.s32.totalorder %s45, 1
        %s860 = scalar_select %p859, %s45, 1
        %s861 = smul.addr %s860, 4
        %s862 = smul.addr %s861, 8
        %s863 = scalar_lea.vmem %s7, %s862
        %p864 = pneg %p255
        %p865 = pneg %p252
        %s866 = sand.u32 %s268, 1
        %s867 = scalar_lea.sflag [#allocation3], %s866
        %s868 = sand.u32 %s268, 1
        %s869 = scalar_lea.vmem [#allocation2], %s868
        %p870 = pneg %p281
        %p871 = pneg %p278
        %s872 = sand.u32 %s40, 1
        %s873 = scalar_lea.sflag [#allocation6], %s872
        %s874 = sand.u32 %s294, 1
        %s875 = smul.addr %s874, 32
        %s876 = scalar_lea.vmem [#allocation5], %s875
        %p877 = pneg %p307
        %p878 = pneg %p304
        %p879 = scmp.lt.s32.totalorder %s45, 1
        %s880 = scalar_select %p879, %s45, 1
        %s881 = scalar_lea.vmem %s10, %s880
        %p882 = pneg %p333
        %p883 = pneg %p330
        %p884 = scmp.lt.s32.totalorder %s45, 1
        %s885 = scalar_select %p884, %s45, 1
        %s886 = scalar_lea.vmem %s11, %s885
        %p887 = pneg %p359
        %p888 = pneg %p356
        %p889 = scmp.lt.s32.totalorder %s45, 1
        %s890 = scalar_select %p889, %s45, 1
        %s891 = scalar_lea.vmem %s12, %s890
        %p892 = pneg %p385
        %p893 = pneg %p382
        %s894 = sand.u32 %s40, 1
        %s895 = scalar_lea.sflag [#allocation6], %s894
        %s896 = sand.u32 %s398, 1
        %s897 = smul.addr %s896, 288
        %s898 = scalar_lea.vmem [#allocation7], %s897
        %p899 = pneg %p411
        %p900 = pneg %p408
        %s901 = sand.u32 %s424, 1
        %s902 = scalar_lea.sflag [#allocation9], %s901
        %s903 = sand.u32 %s424, 1
        %s904 = scalar_lea.vmem [#allocation8], %s903
        %p905 = pneg %p437
        %p906 = pneg %p434
        %p907 = scmp.lt.s32.totalorder %s45, 1
        %s908 = scalar_select %p907, %s45, 1
        %s909 = smul.addr %s908, 8
        %s910 = smul.addr %s909, 8
        %s911 = scalar_lea.vmem %s15, %s910
        %p912 = pneg %p463
        %p913 = pneg %p460
        %p914 = scmp.lt.s32.totalorder %s45, 1
        %s915 = scalar_select %p914, %s45, 1
        %s916 = scalar_lea.vmem %s16, %s915
        %p917 = pneg %p489
        %p918 = pneg %p486
        %p919 = scmp.lt.s32.totalorder %s45, 1
        %s920 = scalar_select %p919, %s45, 1
        %s921 = scalar_lea.vmem %s17, %s920
        %p922 = pneg %p515
        %p923 = pneg %p512
        %p924 = scmp.lt.s32.totalorder %s45, 1
        %s925 = scalar_select %p924, %s45, 1
        %s926 = scalar_lea.vmem %s18, %s925
        %p927 = pneg %p541
        %p928 = pneg %p538
        %p929 = pneg %p567
        %p930 = pneg %p564
        %s931 = smul.u32 2, %s44
        %p932 = scmp.lt.s32.totalorder %s931, 1
        %s933 = scalar_select %p932, %s931, 1
        %s934 = smul.addr %s933, 8
        %s935 = scalar_lea.vmem %s0, %s934
        %s936 = smul.u32 2, %s44
        %s937 = smul.u32 2, %s44
        %p938 = scmp.lt.s32.totalorder %s937, 1
        %s939 = scalar_select %p938, %s937, 1
        %s940 = smul.addr %s939, 8
        %s941 = scalar_lea.vmem %s1, %s940
        %s942 = smul.u32 2, %s44
        %s943 = smul.u32 2, %s44
        %p944 = scmp.lt.s32.totalorder %s943, 1
        %s945 = scalar_select %p944, %s943, 1
        %s946 = scalar_lea.vmem %s2, %s945
        %s947 = smul.u32 2, %s44
        %p948 = scmp.lt.s32.totalorder %s45, 1
        %s949 = scalar_select %p948, %s45, 1
        %s950 = smul.addr %s949, 4
        %s951 = smul.addr %s950, 8
        %s952 = scalar_lea.vmem %s3, %s951
        %p953 = scmp.lt.s32.totalorder %s45, 1
        %s954 = scalar_select %p953, %s45, 1
        %s955 = scalar_lea.vmem %s4, %s954
        %p956 = scmp.lt.s32.totalorder %s45, 1
        %s957 = scalar_select %p956, %s45, 1
        %s958 = smul.addr %s957, 4
        %s959 = smul.addr %s958, 8
        %s960 = scalar_lea.vmem %s5, %s959
        %p961 = scmp.lt.s32.totalorder %s45, 1
        %s962 = scalar_select %p961, %s45, 1
        %s963 = scalar_lea.vmem %s6, %s962
        %p964 = scmp.lt.s32.totalorder %s45, 1
        %s965 = scalar_select %p964, %s45, 1
        %s966 = smul.addr %s965, 4
        %s967 = smul.addr %s966, 8
        %s968 = scalar_lea.vmem %s7, %s967
        %p969 = scmp.lt.s32.totalorder %s45, 1
        %s970 = scalar_select %p969, %s45, 1
        %s971 = scalar_lea.vmem %s10, %s970
        %p972 = scmp.lt.s32.totalorder %s45, 1
        %s973 = scalar_select %p972, %s45, 1
        %s974 = scalar_lea.vmem %s11, %s973
        %p975 = scmp.lt.s32.totalorder %s45, 1
        %s976 = scalar_select %p975, %s45, 1
        %s977 = scalar_lea.vmem %s12, %s976
        %p978 = scmp.lt.s32.totalorder %s45, 1
        %s979 = scalar_select %p978, %s45, 1
        %s980 = smul.addr %s979, 8
        %s981 = smul.addr %s980, 8
        %s982 = scalar_lea.vmem %s15, %s981
        %p983 = scmp.lt.s32.totalorder %s45, 1
        %s984 = scalar_select %p983, %s45, 1
        %s985 = scalar_lea.vmem %s16, %s984
        %p986 = scmp.lt.s32.totalorder %s45, 1
        %s987 = scalar_select %p986, %s45, 1
        %s988 = scalar_lea.vmem %s17, %s987
        %p989 = scmp.lt.s32.totalorder %s45, 1
        %s990 = scalar_select %p989, %s45, 1
        %s991 = scalar_lea.vmem %s18, %s990
        %s992 = smul.u32 2, %s44
        %p993 = scmp.eq.s32.totalorder %s45, 0
        // Predicated region
        $region113: #{tpu_custom_call.1} parent=95 // pred_check
          %p994 = pneg %p993
        $region114: #{tpu_custom_call.1} parent=95 // pred_check_branch
          %996 = sbr.rel (%p994) target = $region116
        $region115: #{tpu_custom_call.1} parent=95 // pred_region
          %v997 = vld [vmem:[%s935] sm:$0xff]
          %v998 = vld [vmem:[%s935 + $0x8] sm:$0xff]
          %vm999 = vcmask 261120
          %1000 = vst.msk [vmem:[#allocation10] sm:$0xff] %vm999, %v997
          %1001 = vst.msk [vmem:[#allocation10 + $0x8] sm:$0xff] %vm999, %v998
        $region116: #{tpu_custom_call.1} parent=95 // pred_fallthru
          _
        %v1002 = vld [vmem:[#allocation10] sm:$0xff]
        %v1003 = vld [vmem:[#allocation10 + $0x8] sm:$0xff]
        %v1004 = vld [vmem:[%s941] sm:$0xff]
        %v1005 = vld [vmem:[%s941 + $0x8] sm:$0xff]
        %v1006 = vld [vmem:[%s946] sm:$0x1]
        %v1007 = vld [vmem:[%s946 + $0x1] sm:$0x1]
        %v1008 = vld [vmem:[%s952] sm:$0xff]
        %v1009 = vld [vmem:[%s952 + $0x8] sm:$0xff]
        %v1010 = vld [vmem:[%s952 + $0x10] sm:$0xff]
        %v1011 = vld [vmem:[%s952 + $0x18] sm:$0xff]
        %v1012 = vld [vmem:[%s955] sm:$0x1]
        %v1014 = vperm.slane %v1012, 0
        %vm1016 = vcmask 261120
        %v1018 = vsel %vm1016, %v1002, 0
        %v1021 = vsel %vm1016, %v1003, 0
        %1023 = vmatpush.msra.mxu0 0.0
        %1024 = vmatpush.msra.mxu0 0.0
        %1025 = vmatpush.msra.mxu0 0.0
        %1026 = vmatpush.msra.mxu0 0.0
        %1027 = vmatpush.msra.mxu0 0.0
        %1028 = vmatpush.msra.mxu0 0.0
        %1029 = vmatpush.msra.mxu0 0.0
        %1030 = vmatpush.msra.mxu0 0.0
        %1031 = vmatpush.msra.mxu0 0.0
        %1032 = vmatpush.msra.mxu0 0.0
        %1033 = vmatpush.msra.mxu0 0.0
        %1034 = vmatpush.msra.mxu0 0.0
        %1035 = vmatpush.msra.mxu0 %v1011
        %1036 = vmatpush.msra.mxu0 %v1010
        %1037 = vmatpush.msra.mxu0 %v1009
        %1038 = vmatpush.msra.mxu0 %v1008
        %1039 = vmatmul.f32.gmra.mxu0 %v1018
        %v1040 = vpop.f32.mrf.mxu0
        %v1041 = vadd.f32 %v1014, %v1040
        %1042 = vmatmul.f32.gmra.mxu0 %v1021
        %v1043 = vpop.f32.mrf.mxu0
        %v1044 = vadd.f32 %v1014, %v1043
        %1045 = vdwg.mxu0
        %v1046 = vld [vmem:[%s960] sm:$0xff]
        %v1047 = vld [vmem:[%s960 + $0x8] sm:$0xff]
        %v1048 = vld [vmem:[%s960 + $0x10] sm:$0xff]
        %v1049 = vld [vmem:[%s960 + $0x18] sm:$0xff]
        %v1050 = vld [vmem:[%s963] sm:$0x1]
        %v1052 = vperm.slane %v1050, 0
        %1054 = vmatpush.msra.mxu0 0.0
        %1055 = vmatpush.msra.mxu0 0.0
        %1056 = vmatpush.msra.mxu0 0.0
        %1057 = vmatpush.msra.mxu0 0.0
        %1058 = vmatpush.msra.mxu0 0.0
        %1059 = vmatpush.msra.mxu0 0.0
        %1060 = vmatpush.msra.mxu0 0.0
        %1061 = vmatpush.msra.mxu0 0.0
        %1062 = vmatpush.msra.mxu0 0.0
        %1063 = vmatpush.msra.mxu0 0.0
        %1064 = vmatpush.msra.mxu0 0.0
        %1065 = vmatpush.msra.mxu0 0.0
        %1066 = vmatpush.msra.mxu0 %v1049
        %1067 = vmatpush.msra.mxu0 %v1048
        %1068 = vmatpush.msra.mxu0 %v1047
        %1069 = vmatpush.msra.mxu0 %v1046
        %1070 = vmatmul.f32.gmra.mxu0 %v1018
        %v1071 = vpop.f32.mrf.mxu0
        %v1072 = vadd.f32 %v1052, %v1071
        %1073 = vmatmul.f32.gmra.mxu0 %v1021
        %v1074 = vpop.f32.mrf.mxu0
        %v1075 = vadd.f32 %v1052, %v1074
        %1076 = vdwg.mxu0
        %v1077 = vld [vmem:[%s968] sm:$0xff]
        %v1078 = vld [vmem:[%s968 + $0x8] sm:$0xff]
        %v1079 = vld [vmem:[%s968 + $0x10] sm:$0xff]
        %v1080 = vld [vmem:[%s968 + $0x18] sm:$0xff]
        %v1081 = vld [vmem:[%s780] sm:$0x1]
        %v1083 = vperm.slane %v1081, 0
        %1085 = vmatpush.msra.mxu0 0.0
        %1086 = vmatpush.msra.mxu0 0.0
        %1087 = vmatpush.msra.mxu0 0.0
        %1088 = vmatpush.msra.mxu0 0.0
        %1089 = vmatpush.msra.mxu0 0.0
        %1090 = vmatpush.msra.mxu0 0.0
        %1091 = vmatpush.msra.mxu0 0.0
        %1092 = vmatpush.msra.mxu0 0.0
        %1093 = vmatpush.msra.mxu0 0.0
        %1094 = vmatpush.msra.mxu0 0.0
        %1095 = vmatpush.msra.mxu0 0.0
        %1096 = vmatpush.msra.mxu0 0.0
        %1097 = vmatpush.msra.mxu0 %v1080
        %1098 = vmatpush.msra.mxu0 %v1079
        %1099 = vmatpush.msra.mxu0 %v1078
        %1100 = vmatpush.msra.mxu0 %v1077
        %1101 = vmatmul.f32.gmra.mxu0 %v1018
        %v1102 = vpop.f32.mrf.mxu0
        %v1103 = vadd.f32 %v1083, %v1102
        %1104 = vmatmul.f32.gmra.mxu0 %v1021
        %v1105 = vpop.f32.mrf.mxu0
        %v1106 = vadd.f32 %v1083, %v1105
        %1107 = vdwg.mxu0
        %v1108 = vld [vmem:[%s790] sm:$0xff]
        %v1109 = vld [vmem:[%s790 + $0x8] sm:$0xff]
        %v1110 = vld [vmem:[%s790 + $0x10] sm:$0xff]
        %v1111 = vld [vmem:[%s790 + $0x18] sm:$0xff]
        %v1114 = vperm.slane %v1006, 0
        %v1115 = vperm.slane %v1007, 0
        %vm1118 = vcmask 130048
        %v1120 = vsel %vm1118, %v1041, 0
        %v1123 = vsel %vm1118, %v1072, 0
        %1125 = vmatpush.xpose.msra.mxu0 0.0
        %1126 = vmatpush.xpose.msra.mxu0 0.0
        %1127 = vmatpush.xpose.msra.mxu0 0.0
        %1128 = vmatpush.xpose.msra.mxu0 0.0
        %1129 = vmatpush.xpose.msra.mxu0 0.0
        %1130 = vmatpush.xpose.msra.mxu0 0.0
        %1131 = vmatpush.xpose.msra.mxu0 0.0
        %1132 = vmatpush.xpose.msra.mxu0 0.0
        %1133 = vmatpush.xpose.msra.mxu0 0.0
        %1134 = vmatpush.xpose.msra.mxu0 0.0
        %1135 = vmatpush.xpose.msra.mxu0 0.0
        %1136 = vmatpush.xpose.msra.mxu0 0.0
        %1137 = vmatpush.xpose.msra.mxu0 0.0
        %1138 = vmatpush.xpose.msra.mxu0 0.0
        %1139 = vmatpush.xpose.msra.mxu0 0.0
        %1140 = vmatpush.xpose.msra.mxu0 %v1123
        %1141 = vmatmul.f32.gmra.mxu0 %v1120
        %v1142 = vpop.f32.mrf.mxu0
        %v1143 = vadd.f32 %v1114, %v1142
        %1144 = vdwg.mxu0
        %v1146 = vsel %vm1118, %v1044, 0
        %v1149 = vsel %vm1118, %v1075, 0
        %1151 = vmatpush.xpose.msra.mxu0 0.0
        %1152 = vmatpush.xpose.msra.mxu0 0.0
        %1153 = vmatpush.xpose.msra.mxu0 0.0
        %1154 = vmatpush.xpose.msra.mxu0 0.0
        %1155 = vmatpush.xpose.msra.mxu0 0.0
        %1156 = vmatpush.xpose.msra.mxu0 0.0
        %1157 = vmatpush.xpose.msra.mxu0 0.0
        %1158 = vmatpush.xpose.msra.mxu0 0.0
        %1159 = vmatpush.xpose.msra.mxu0 0.0
        %1160 = vmatpush.xpose.msra.mxu0 0.0
        %1161 = vmatpush.xpose.msra.mxu0 0.0
        %1162 = vmatpush.xpose.msra.mxu0 0.0
        %1163 = vmatpush.xpose.msra.mxu0 0.0
        %1164 = vmatpush.xpose.msra.mxu0 0.0
        %1165 = vmatpush.xpose.msra.mxu0 0.0
        %1166 = vmatpush.xpose.msra.mxu0 %v1149
        %1167 = vmatmul.f32.gmra.mxu0 %v1146
        %v1168 = vpop.f32.mrf.mxu0
        %v1169 = vadd.f32 %v1115, %v1168
        %1170 = vdwg.mxu0
        %vm1171 = vcmask 64512
        %v1172 = vsel %vm1171, %v1143, -inf
        %1173 = vmax.xlane.f32.xlu0 %v1172
        %v1174 = vpop.xlane.xlu0 %1173
        %v1175 = vsel %vm1171, %v1169, -inf
        %1176 = vmax.xlane.f32.xlu0 %v1175
        %v1177 = vpop.xlane.xlu0 %1176
        %v1178 = vsub.f32 %v1143, %v1174
        %v1179 = vsub.f32 %v1169, %v1177
        %v1180 = vmul.f32 %v1178, 1.442695
        %v1181 = vpow.pop %v1180
        %v1182 = vmul.f32 %v1179, 1.442695
        %v1183 = vpow.pop %v1182
        %v1184 = vsel %vm1171, %v1181, 0.0
        %1185 = vadd.xlane.f32.xlu0 %v1184
        %v1186 = vpop.xlane.xlu0 %1185
        %v1187 = vsel %vm1171, %v1183, 0.0
        %1188 = vadd.xlane.f32.xlu0 %v1187
        %v1189 = vpop.xlane.xlu0 %1188
        %v1190 = vrcp.pop %v1186
        %v1191 = vmul.f32 %v1186, %v1190
        %v1192 = vsub.f32 1.0, %v1191
        %v1193 = vmul.f32 %v1190, %v1192
        %v1194 = vadd.f32 %v1190, %v1193
        %vm1195 = vweird.f32 %v1186
        %vm1196 = vweird.f32 %v1190
        %vm1197 = vmor %vm1195, %vm1196
        %v1198 = vsel %vm1197, %v1190, %v1194
        %v1199 = vand.u32 2147483647, %v1186
        %vm1200 = vcmp.eq.f32.partialorder %v1199, 8.507059e+37
        %v1201 = vand.u32 %v1186, 2147483648
        %v1202 = vor.u32 1.1754944e-38, %v1201
        %v1203 = vsel %vm1200, %v1202, %v1198
        %v1204 = vrcp.pop %v1189
        %v1205 = vmul.f32 %v1189, %v1204
        %v1206 = vsub.f32 1.0, %v1205
        %v1207 = vmul.f32 %v1204, %v1206
        %v1208 = vadd.f32 %v1204, %v1207
        %vm1209 = vweird.f32 %v1189
        %vm1210 = vweird.f32 %v1204
        %vm1211 = vmor %vm1209, %vm1210
        %v1212 = vsel %vm1211, %v1204, %v1208
        %v1213 = vand.u32 2147483647, %v1189
        %vm1214 = vcmp.eq.f32.partialorder %v1213, 8.507059e+37
        %v1215 = vand.u32 %v1189, 2147483648
        %v1216 = vor.u32 1.1754944e-38, %v1215
        %v1217 = vsel %vm1214, %v1216, %v1212
        %v1218 = vmul.f32 %v1181, %v1203
        %v1219 = vmul.f32 %v1183, %v1217
        %v1221 = vsel %vm1171, %v1218, 0
        %1223 = vmatpush.msra.mxu0 0.0
        %1224 = vmatpush.msra.mxu0 0.0
        %1225 = vmatpush.msra.mxu0 0.0
        %1226 = vmatpush.msra.mxu0 0.0
        %1227 = vmatpush.msra.mxu0 0.0
        %1228 = vmatpush.msra.mxu0 0.0
        %1229 = vmatpush.msra.mxu0 0.0
        %1230 = vmatpush.msra.mxu0 0.0
        %1231 = vmatpush.msra.mxu0 0.0
        %1232 = vmatpush.msra.mxu0 0.0
        %1233 = vmatpush.msra.mxu0 0.0
        %1234 = vmatpush.msra.mxu0 0.0
        %1235 = vmatpush.msra.mxu0 0.0
        %1236 = vmatpush.msra.mxu0 0.0
        %1237 = vmatpush.msra.mxu0 0.0
        %1238 = vmatpush.msra.mxu0 %v1103
        %1239 = vmatmul.f32.gmra.mxu0 %v1221
        %v1240 = vpop.f32.mrf.mxu0
        %v1241 = vadd.f32 0.0, %v1240
        %1242 = vdwg.mxu0
        %v1244 = vsel %vm1171, %v1219, 0
        %1246 = vmatpush.msra.mxu0 0.0
        %1247 = vmatpush.msra.mxu0 0.0
        %1248 = vmatpush.msra.mxu0 0.0
        %1249 = vmatpush.msra.mxu0 0.0
        %1250 = vmatpush.msra.mxu0 0.0
        %1251 = vmatpush.msra.mxu0 0.0
        %1252 = vmatpush.msra.mxu0 0.0
        %1253 = vmatpush.msra.mxu0 0.0
        %1254 = vmatpush.msra.mxu0 0.0
        %1255 = vmatpush.msra.mxu0 0.0
        %1256 = vmatpush.msra.mxu0 0.0
        %1257 = vmatpush.msra.mxu0 0.0
        %1258 = vmatpush.msra.mxu0 0.0
        %1259 = vmatpush.msra.mxu0 0.0
        %1260 = vmatpush.msra.mxu0 0.0
        %1261 = vmatpush.msra.mxu0 %v1106
        %1262 = vmatmul.f32.gmra.mxu0 %v1244
        %v1263 = vpop.f32.mrf.mxu0
        %v1264 = vadd.f32 0.0, %v1263
        %1265 = vdwg.mxu0
        %1266 = vrot.lane.b32.xlu0 %v1041, 112
        %v1267 = vpop.permute.xlu0 %1266
        %1268 = vrot.lane.b32.xlu0 %v1072, 112
        %v1269 = vpop.permute.xlu0 %1268
        %v1270 = vsel %vm1118, %v1267, 0
        %v1272 = vsel %vm1118, %v1269, 0
        %1274 = vmatpush.xpose.msra.mxu0 0.0
        %1275 = vmatpush.xpose.msra.mxu0 0.0
        %1276 = vmatpush.xpose.msra.mxu0 0.0
        %1277 = vmatpush.xpose.msra.mxu0 0.0
        %1278 = vmatpush.xpose.msra.mxu0 0.0
        %1279 = vmatpush.xpose.msra.mxu0 0.0
        %1280 = vmatpush.xpose.msra.mxu0 0.0
        %1281 = vmatpush.xpose.msra.mxu0 0.0
        %1282 = vmatpush.xpose.msra.mxu0 0.0
        %1283 = vmatpush.xpose.msra.mxu0 0.0
        %1284 = vmatpush.xpose.msra.mxu0 0.0
        %1285 = vmatpush.xpose.msra.mxu0 0.0
        %1286 = vmatpush.xpose.msra.mxu0 0.0
        %1287 = vmatpush.xpose.msra.mxu0 0.0
        %1288 = vmatpush.xpose.msra.mxu0 0.0
        %1289 = vmatpush.xpose.msra.mxu0 %v1272
        %1290 = vmatmul.f32.gmra.mxu0 %v1270
        %v1291 = vpop.f32.mrf.mxu0
        %v1292 = vadd.f32 %v1114, %v1291
        %1293 = vdwg.mxu0
        %1294 = vrot.lane.b32.xlu0 %v1044, 112
        %v1295 = vpop.permute.xlu0 %1294
        %1296 = vrot.lane.b32.xlu0 %v1075, 112
        %v1297 = vpop.permute.xlu0 %1296
        %v1298 = vsel %vm1118, %v1295, 0
        %v1300 = vsel %vm1118, %v1297, 0
        %1302 = vmatpush.xpose.msra.mxu0 0.0
        %1303 = vmatpush.xpose.msra.mxu0 0.0
        %1304 = vmatpush.xpose.msra.mxu0 0.0
        %1305 = vmatpush.xpose.msra.mxu0 0.0
        %1306 = vmatpush.xpose.msra.mxu0 0.0
        %1307 = vmatpush.xpose.msra.mxu0 0.0
        %1308 = vmatpush.xpose.msra.mxu0 0.0
        %1309 = vmatpush.xpose.msra.mxu0 0.0
        %1310 = vmatpush.xpose.msra.mxu0 0.0
        %1311 = vmatpush.xpose.msra.mxu0 0.0
        %1312 = vmatpush.xpose.msra.mxu0 0.0
        %1313 = vmatpush.xpose.msra.mxu0 0.0
        %1314 = vmatpush.xpose.msra.mxu0 0.0
        %1315 = vmatpush.xpose.msra.mxu0 0.0
        %1316 = vmatpush.xpose.msra.mxu0 0.0
        %1317 = vmatpush.xpose.msra.mxu0 %v1300
        %1318 = vmatmul.f32.gmra.mxu0 %v1298
        %v1319 = vpop.f32.mrf.mxu0
        %v1320 = vadd.f32 %v1115, %v1319
        %1321 = vdwg.mxu0
        %v1322 = vsel %vm1171, %v1292, -inf
        %1323 = vmax.xlane.f32.xlu0 %v1322
        %v1324 = vpop.xlane.xlu0 %1323
        %v1325 = vsel %vm1171, %v1320, -inf
        %1326 = vmax.xlane.f32.xlu0 %v1325
        %v1327 = vpop.xlane.xlu0 %1326
        %v1328 = vsub.f32 %v1292, %v1324
        %v1329 = vsub.f32 %v1320, %v1327
        %v1330 = vmul.f32 %v1328, 1.442695
        %v1331 = vpow.pop %v1330
        %v1332 = vmul.f32 %v1329, 1.442695
        %v1333 = vpow.pop %v1332
        %v1334 = vsel %vm1171, %v1331, 0.0
        %1335 = vadd.xlane.f32.xlu0 %v1334
        %v1336 = vpop.xlane.xlu0 %1335
        %v1337 = vsel %vm1171, %v1333, 0.0
        %1338 = vadd.xlane.f32.xlu0 %v1337
        %v1339 = vpop.xlane.xlu0 %1338
        %v1340 = vrcp.pop %v1336
        %v1341 = vmul.f32 %v1336, %v1340
        %v1342 = vsub.f32 1.0, %v1341
        %v1343 = vmul.f32 %v1340, %v1342
        %v1344 = vadd.f32 %v1340, %v1343
        %vm1345 = vweird.f32 %v1336
        %vm1346 = vweird.f32 %v1340
        %vm1347 = vmor %vm1345, %vm1346
        %v1348 = vsel %vm1347, %v1340, %v1344
        %v1349 = vand.u32 2147483647, %v1336
        %vm1350 = vcmp.eq.f32.partialorder %v1349, 8.507059e+37
        %v1351 = vand.u32 %v1336, 2147483648
        %v1352 = vor.u32 1.1754944e-38, %v1351
        %v1353 = vsel %vm1350, %v1352, %v1348
        %v1354 = vrcp.pop %v1339
        %v1355 = vmul.f32 %v1339, %v1354
        %v1356 = vsub.f32 1.0, %v1355
        %v1357 = vmul.f32 %v1354, %v1356
        %v1358 = vadd.f32 %v1354, %v1357
        %vm1359 = vweird.f32 %v1339
        %vm1360 = vweird.f32 %v1354
        %vm1361 = vmor %vm1359, %vm1360
        %v1362 = vsel %vm1361, %v1354, %v1358
        %v1363 = vand.u32 2147483647, %v1339
        %vm1364 = vcmp.eq.f32.partialorder %v1363, 8.507059e+37
        %v1365 = vand.u32 %v1339, 2147483648
        %v1366 = vor.u32 1.1754944e-38, %v1365
        %v1367 = vsel %vm1364, %v1366, %v1362
        %v1368 = vmul.f32 %v1331, %v1353
        %v1369 = vmul.f32 %v1333, %v1367
        %1371 = vrot.lane.b32.xlu0 %v1103, 112
        %v1372 = vpop.permute.xlu0 %1371
        %v1375 = vsel %vm1171, %v1368, 0
        %1377 = vmatpush.msra.mxu0 0.0
        %1378 = vmatpush.msra.mxu0 0.0
        %1379 = vmatpush.msra.mxu0 0.0
        %1380 = vmatpush.msra.mxu0 0.0
        %1381 = vmatpush.msra.mxu0 0.0
        %1382 = vmatpush.msra.mxu0 0.0
        %1383 = vmatpush.msra.mxu0 0.0
        %1384 = vmatpush.msra.mxu0 0.0
        %1385 = vmatpush.msra.mxu0 0.0
        %1386 = vmatpush.msra.mxu0 0.0
        %1387 = vmatpush.msra.mxu0 0.0
        %1388 = vmatpush.msra.mxu0 0.0
        %1389 = vmatpush.msra.mxu0 0.0
        %1390 = vmatpush.msra.mxu0 0.0
        %1391 = vmatpush.msra.mxu0 0.0
        %1392 = vmatpush.msra.mxu0 %v1372
        %1393 = vmatmul.f32.gmra.mxu0 %v1375
        %v1394 = vpop.f32.mrf.mxu0
        %v1395 = vadd.f32 0.0, %v1394
        %1396 = vdwg.mxu0
        %1398 = vrot.lane.b32.xlu0 %v1106, 112
        %v1399 = vpop.permute.xlu0 %1398
        %v1402 = vsel %vm1171, %v1369, 0
        %1404 = vmatpush.msra.mxu0 0.0
        %1405 = vmatpush.msra.mxu0 0.0
        %1406 = vmatpush.msra.mxu0 0.0
        %1407 = vmatpush.msra.mxu0 0.0
        %1408 = vmatpush.msra.mxu0 0.0
        %1409 = vmatpush.msra.mxu0 0.0
        %1410 = vmatpush.msra.mxu0 0.0
        %1411 = vmatpush.msra.mxu0 0.0
        %1412 = vmatpush.msra.mxu0 0.0
        %1413 = vmatpush.msra.mxu0 0.0
        %1414 = vmatpush.msra.mxu0 0.0
        %1415 = vmatpush.msra.mxu0 0.0
        %1416 = vmatpush.msra.mxu0 0.0
        %1417 = vmatpush.msra.mxu0 0.0
        %1418 = vmatpush.msra.mxu0 0.0
        %1419 = vmatpush.msra.mxu0 %v1399
        %1420 = vmatmul.f32.gmra.mxu0 %v1402
        %v1421 = vpop.f32.mrf.mxu0
        %v1422 = vadd.f32 0.0, %v1421
        %1423 = vdwg.mxu0
        %v1425 = vsel %vm1118, %v1395, 0
        %v1428 = vsel %vm1118, %v1422, 0
        %1430 = vmatpush.msra.mxu0 0.0
        %1431 = vmatpush.msra.mxu0 0.0
        %1432 = vmatpush.msra.mxu0 0.0
        %1433 = vmatpush.msra.mxu0 0.0
        %1434 = vmatpush.msra.mxu0 0.0
        %1435 = vmatpush.msra.mxu0 0.0
        %1436 = vmatpush.msra.mxu0 0.0
        %1437 = vmatpush.msra.mxu0 0.0
        %1438 = vmatpush.msra.mxu0 0.0
        %1439 = vmatpush.msra.mxu0 0.0
        %1440 = vmatpush.msra.mxu0 0.0
        %1441 = vmatpush.msra.mxu0 0.0
        %1442 = vmatpush.msra.mxu0 0.0
        %1443 = vmatpush.msra.mxu0 0.0
        %1444 = vmatpush.msra.mxu0 %v1111
        %1445 = vmatpush.msra.mxu0 %v1110
        %1446 = vmatmul.f32.gmra.mxu0 %v1425
        %v1447 = vpop.f32.mrf.mxu0
        %v1448 = vadd.f32 0.0, %v1447
        %1449 = vmatmul.f32.gmra.mxu0 %v1428
        %v1450 = vpop.f32.mrf.mxu0
        %v1451 = vadd.f32 0.0, %v1450
        %1452 = vdwg.mxu0
        %v1454 = vsel %vm1118, %v1241, 0
        %v1457 = vsel %vm1118, %v1264, 0
        %1459 = vmatpush.msra.mxu0 0.0
        %1460 = vmatpush.msra.mxu0 0.0
        %1461 = vmatpush.msra.mxu0 0.0
        %1462 = vmatpush.msra.mxu0 0.0
        %1463 = vmatpush.msra.mxu0 0.0
        %1464 = vmatpush.msra.mxu0 0.0
        %1465 = vmatpush.msra.mxu0 0.0
        %1466 = vmatpush.msra.mxu0 0.0
        %1467 = vmatpush.msra.mxu0 0.0
        %1468 = vmatpush.msra.mxu0 0.0
        %1469 = vmatpush.msra.mxu0 0.0
        %1470 = vmatpush.msra.mxu0 0.0
        %1471 = vmatpush.msra.mxu0 0.0
        %1472 = vmatpush.msra.mxu0 0.0
        %1473 = vmatpush.msra.mxu0 %v1109
        %1474 = vmatpush.msra.mxu0 %v1108
        %1475 = vmatmul.f32.gmra.mxu0 %v1454
        %v1476 = vpop.f32.mrf.mxu0
        %v1477 = vadd.f32 %v1448, %v1476
        %1478 = vmatmul.f32.gmra.mxu0 %v1457
        %v1479 = vpop.f32.mrf.mxu0
        %v1480 = vadd.f32 %v1451, %v1479
        %1481 = vdwg.mxu0
        %v1482 = vld [vmem:[%s971] sm:$0x1]
        %v1484 = vperm.slane %v1482, 0
        %v1486 = vadd.f32 %v1477, %v1484
        %v1487 = vadd.f32 %v1480, %v1484
        %v1488 = vadd.f32 %v1486, %v1002
        %v1489 = vadd.f32 %v1487, %v1003
        %v1490 = vld [vmem:[%s974] sm:$0x1]
        %v1491 = vld [vmem:[%s977] sm:$0x1]
        %v1492 = vsel %vm1016, %v1488, 0.0
        %1493 = vadd.xlane.f32.xlu0 %v1492
        %v1494 = vpop.xlane.xlu0 %1493
        %v1495 = vsel %vm1016, %v1489, 0.0
        %1496 = vadd.xlane.f32.xlu0 %v1495
        %v1497 = vpop.xlane.xlu0 %1496
        %v1498 = vrcp.pop 32.0
        %v1499 = vmul.f32 32.0, %v1498
        %v1500 = vsub.f32 1.0, %v1499
        %v1501 = vmul.f32 %v1498, %v1500
        %v1502 = vadd.f32 %v1498, %v1501
        %vm1503 = vweird.f32 %v1498
        %v1504 = vsel %vm1503, %v1498, %v1502
        %v1505 = vmul.f32 %v1494, %v1504
        %v1506 = vmul.f32 %v1497, %v1504
        %v1507 = vsub.f32 %v1488, %v1505
        %v1508 = vsub.f32 %v1489, %v1506
        %v1509 = vmul.f32 %v1507, %v1507
        %v1510 = vmul.f32 %v1508, %v1508
        %v1511 = vsel %vm1016, %v1509, 0.0
        %1512 = vadd.xlane.f32.xlu0 %v1511
        %v1513 = vpop.xlane.xlu0 %1512
        %v1514 = vsel %vm1016, %v1510, 0.0
        %1515 = vadd.xlane.f32.xlu0 %v1514
        %v1516 = vpop.xlane.xlu0 %1515
        %v1517 = vmul.f32 %v1513, %v1504
        %v1518 = vmul.f32 %v1516, %v1504
        %v1519 = vadd.f32 %v1517, 1e-05
        %v1520 = vadd.f32 %v1518, 1e-05
        %v1521 = vrsqrt.pop %v1519
        %v1522 = vmul.f32 %v1521, %v1519
        %v1523 = vmul.f32 %v1522, %v1521
        %v1524 = vmul.f32 0.5, %v1523
        %v1525 = vsub.f32 1.5, %v1524
        %v1526 = vmul.f32 %v1521, %v1525
        %vm1527 = vweird.f32 %v1519
        %vm1528 = vweird.f32 %v1521
        %vm1529 = vmor %vm1527, %vm1528
        %v1530 = vsel %vm1529, %v1521, %v1526
        %v1531 = vrsqrt.pop %v1520
        %v1532 = vmul.f32 %v1531, %v1520
        %v1533 = vmul.f32 %v1532, %v1531
        %v1534 = vmul.f32 0.5, %v1533
        %v1535 = vsub.f32 1.5, %v1534
        %v1536 = vmul.f32 %v1531, %v1535
        %vm1537 = vweird.f32 %v1520
        %vm1538 = vweird.f32 %v1531
        %vm1539 = vmor %vm1537, %vm1538
        %v1540 = vsel %vm1539, %v1531, %v1536
        %v1541 = vmul.f32 %v1507, %v1530
        %v1542 = vmul.f32 %v1508, %v1540
        %v1544 = vperm.slane %v1490, 0
        %v1546 = vmul.f32 %v1541, %v1544
        %v1547 = vmul.f32 %v1542, %v1544
        %v1549 = vperm.slane %v1491, 0
        %v1551 = vadd.f32 %v1546, %v1549
        %v1552 = vadd.f32 %v1547, %v1549
        %1554 = vset.pattern.permute.xlu0 0
        %1555 = vperm.xlu0 %1554, %v1004
        %v1556 = vpop.permute.xlu0 %1555
        %1559 = vset.pattern.permute.xlu0 0
        %1560 = vperm.xlu0 %1559, %v1005
        %v1561 = vpop.permute.xlu0 %1560
        %v1563 = vmul.f32 %v1551, %v1556
        %v1564 = vmul.f32 %v1552, %v1561
        %v1565 = vlaneseq
        %v1566 = vshrl.u32 %v1565, 7
        %s1567 = scalar_lea.vmem %s800, 128 [#allocation7]
        %v1568 = vld [vmem:[%s1567] sm:$0xff]
        %v1569 = vld [vmem:[%s1567 + $0x8] sm:$0xff]
        %v1570 = vld [vmem:[%s1567 + $0x10] sm:$0xff]
        %v1571 = vld [vmem:[%s1567 + $0x18] sm:$0xff]
        %v1572 = vrot.slane %v1563, 4
        %v1573 = vrot.slane %v1564, 4
        %vm1574 = vcmp.lt.s32.totalorder %v1566, 4
        %v1575 = vsel %vm1574, %v1572, %v1573
        %v1576 = vsel %vm1574, %v1573, %v1572
        %vm1577 = vcmp.ge.s32.totalorder %v1566, 4
        %v1578 = vsel %vm1577, 1, 0
        %vm1579 = vcmp.eq.s32.totalorder %v1578, 1
        %v1580 = vsel %vm1579, %v1576, 0.0
        %v1581 = vsel %vm1579, %v1575, 0.0
        %v1582 = vld [vmem:[%s800] sm:$0xff]
        %v1583 = vld [vmem:[%s800 + $0x8] sm:$0xff]
        %v1584 = vld [vmem:[%s800 + $0x10] sm:$0xff]
        %v1585 = vld [vmem:[%s800 + $0x18] sm:$0xff]
        %v1587 = vsel %vm1016, %v1580, 0
        %v1590 = vsel %vm1016, %v1581, 0
        %1592 = vmatpush.msra.mxu0 0.0
        %1593 = vmatpush.msra.mxu0 0.0
        %1594 = vmatpush.msra.mxu0 0.0
        %1595 = vmatpush.msra.mxu0 0.0
        %1596 = vmatpush.msra.mxu0 0.0
        %1597 = vmatpush.msra.mxu0 0.0
        %1598 = vmatpush.msra.mxu0 0.0
        %1599 = vmatpush.msra.mxu0 0.0
        %1600 = vmatpush.msra.mxu0 0.0
        %1601 = vmatpush.msra.mxu0 0.0
        %1602 = vmatpush.msra.mxu0 0.0
        %1603 = vmatpush.msra.mxu0 0.0
        %1604 = vmatpush.msra.mxu0 %v1585
        %1605 = vmatpush.msra.mxu0 %v1584
        %1606 = vmatpush.msra.mxu0 %v1583
        %1607 = vmatpush.msra.mxu0 %v1582
        %1608 = vmatmul.f32.gmra.mxu0 %v1587
        %v1609 = vpop.f32.mrf.mxu0
        %v1610 = vadd.f32 0.0, %v1609
        %1611 = vmatmul.f32.gmra.mxu0 %v1590
        %v1612 = vpop.f32.mrf.mxu0
        %v1613 = vadd.f32 0.0, %v1612
        %1614 = vdwg.mxu0
        %v1616 = vsel %vm1016, %v1563, 0
        %v1619 = vsel %vm1016, %v1564, 0
        %1621 = vmatpush.msra.mxu0 0.0
        %1622 = vmatpush.msra.mxu0 0.0
        %1623 = vmatpush.msra.mxu0 0.0
        %1624 = vmatpush.msra.mxu0 0.0
        %1625 = vmatpush.msra.mxu0 0.0
        %1626 = vmatpush.msra.mxu0 0.0
        %1627 = vmatpush.msra.mxu0 0.0
        %1628 = vmatpush.msra.mxu0 0.0
        %1629 = vmatpush.msra.mxu0 0.0
        %1630 = vmatpush.msra.mxu0 0.0
        %1631 = vmatpush.msra.mxu0 0.0
        %1632 = vmatpush.msra.mxu0 0.0
        %1633 = vmatpush.msra.mxu0 %v1571
        %1634 = vmatpush.msra.mxu0 %v1570
        %1635 = vmatpush.msra.mxu0 %v1569
        %1636 = vmatpush.msra.mxu0 %v1568
        %1637 = vmatmul.f32.gmra.mxu0 %v1616
        %v1638 = vpop.f32.mrf.mxu0
        %v1639 = vadd.f32 %v1610, %v1638
        %1640 = vmatmul.f32.gmra.mxu0 %v1619
        %v1641 = vpop.f32.mrf.mxu0
        %v1642 = vadd.f32 %v1613, %v1641
        %1643 = vdwg.mxu0
        %v1644 = vrot.slane %v1563, 5
        %v1645 = vrot.slane %v1564, 5
        %vm1646 = vcmp.lt.s32.totalorder %v1566, 3
        %v1647 = vsel %vm1646, %v1644, %v1645
        %v1648 = vsel %vm1646, %v1645, %v1644
        %vm1649 = vcmp.ge.s32.totalorder %v1566, 3
        %v1650 = vsel %vm1649, 1, 0
        %vm1651 = vcmp.eq.s32.totalorder %v1650, 1
        %v1652 = vsel %vm1651, %v1648, 0.0
        %v1653 = vsel %vm1651, %v1647, 0.0
        %s1654 = scalar_lea.vmem %s800, 32 [#allocation7]
        %v1655 = vld [vmem:[%s1654] sm:$0xff]
        %v1656 = vld [vmem:[%s1654 + $0x8] sm:$0xff]
        %v1657 = vld [vmem:[%s1654 + $0x10] sm:$0xff]
        %v1658 = vld [vmem:[%s1654 + $0x18] sm:$0xff]
        %v1660 = vsel %vm1016, %v1652, 0
        %v1663 = vsel %vm1016, %v1653, 0
        %1665 = vmatpush.msra.mxu0 0.0
        %1666 = vmatpush.msra.mxu0 0.0
        %1667 = vmatpush.msra.mxu0 0.0
        %1668 = vmatpush.msra.mxu0 0.0
        %1669 = vmatpush.msra.mxu0 0.0
        %1670 = vmatpush.msra.mxu0 0.0
        %1671 = vmatpush.msra.mxu0 0.0
        %1672 = vmatpush.msra.mxu0 0.0
        %1673 = vmatpush.msra.mxu0 0.0
        %1674 = vmatpush.msra.mxu0 0.0
        %1675 = vmatpush.msra.mxu0 0.0
        %1676 = vmatpush.msra.mxu0 0.0
        %1677 = vmatpush.msra.mxu0 %v1658
        %1678 = vmatpush.msra.mxu0 %v1657
        %1679 = vmatpush.msra.mxu0 %v1656
        %1680 = vmatpush.msra.mxu0 %v1655
        %1681 = vmatmul.f32.gmra.mxu0 %v1660
        %v1682 = vpop.f32.mrf.mxu0
        %v1683 = vadd.f32 0.0, %v1682
        %1684 = vmatmul.f32.gmra.mxu0 %v1663
        %v1685 = vpop.f32.mrf.mxu0
        %v1686 = vadd.f32 0.0, %v1685
        %1687 = vdwg.mxu0
        %v1688 = vadd.f32 %v1639, %v1683
        %v1689 = vadd.f32 %v1642, %v1686
        %v1690 = vrot.slane %v1563, 6
        %v1691 = vrot.slane %v1564, 6
        %vm1692 = vcmp.lt.s32.totalorder %v1566, 2
        %v1693 = vsel %vm1692, %v1690, %v1691
        %v1694 = vsel %vm1692, %v1691, %v1690
        %vm1695 = vcmp.ge.s32.totalorder %v1566, 2
        %v1696 = vsel %vm1695, 1, 0
        %vm1697 = vcmp.eq.s32.totalorder %v1696, 1
        %v1698 = vsel %vm1697, %v1694, 0.0
        %v1699 = vsel %vm1697, %v1693, 0.0
        %s1700 = scalar_lea.vmem %s800, 64 [#allocation7]
        %v1701 = vld [vmem:[%s1700] sm:$0xff]
        %v1702 = vld [vmem:[%s1700 + $0x8] sm:$0xff]
        %v1703 = vld [vmem:[%s1700 + $0x10] sm:$0xff]
        %v1704 = vld [vmem:[%s1700 + $0x18] sm:$0xff]
        %v1706 = vsel %vm1016, %v1698, 0
        %v1709 = vsel %vm1016, %v1699, 0
        %1711 = vmatpush.msra.mxu0 0.0
        %1712 = vmatpush.msra.mxu0 0.0
        %1713 = vmatpush.msra.mxu0 0.0
        %1714 = vmatpush.msra.mxu0 0.0
        %1715 = vmatpush.msra.mxu0 0.0
        %1716 = vmatpush.msra.mxu0 0.0
        %1717 = vmatpush.msra.mxu0 0.0
        %1718 = vmatpush.msra.mxu0 0.0
        %1719 = vmatpush.msra.mxu0 0.0
        %1720 = vmatpush.msra.mxu0 0.0
        %1721 = vmatpush.msra.mxu0 0.0
        %1722 = vmatpush.msra.mxu0 0.0
        %1723 = vmatpush.msra.mxu0 %v1704
        %1724 = vmatpush.msra.mxu0 %v1703
        %1725 = vmatpush.msra.mxu0 %v1702
        %1726 = vmatpush.msra.mxu0 %v1701
        %1727 = vmatmul.f32.gmra.mxu0 %v1706
        %v1728 = vpop.f32.mrf.mxu0
        %v1729 = vadd.f32 0.0, %v1728
        %1730 = vmatmul.f32.gmra.mxu0 %v1709
        %v1731 = vpop.f32.mrf.mxu0
        %v1732 = vadd.f32 0.0, %v1731
        %1733 = vdwg.mxu0
        %v1734 = vadd.f32 %v1688, %v1729
        %v1735 = vadd.f32 %v1689, %v1732
        %v1736 = vrot.slane %v1563, 7
        %v1737 = vrot.slane %v1564, 7
        %vm1738 = vcmp.lt.s32.totalorder %v1566, 1
        %v1739 = vsel %vm1738, %v1736, %v1737
        %v1740 = vsel %vm1738, %v1737, %v1736
        %vm1741 = vcmp.ge.s32.totalorder %v1566, 1
        %v1742 = vsel %vm1741, 1, 0
        %vm1743 = vcmp.eq.s32.totalorder %v1742, 1
        %v1744 = vsel %vm1743, %v1740, 0.0
        %v1745 = vsel %vm1743, %v1739, 0.0
        %s1746 = scalar_lea.vmem %s800, 96 [#allocation7]
        %v1747 = vld [vmem:[%s1746] sm:$0xff]
        %v1748 = vld [vmem:[%s1746 + $0x8] sm:$0xff]
        %v1749 = vld [vmem:[%s1746 + $0x10] sm:$0xff]
        %v1750 = vld [vmem:[%s1746 + $0x18] sm:$0xff]
        %v1752 = vsel %vm1016, %v1744, 0
        %v1755 = vsel %vm1016, %v1745, 0
        %1757 = vmatpush.msra.mxu0 0.0
        %1758 = vmatpush.msra.mxu0 0.0
        %1759 = vmatpush.msra.mxu0 0.0
        %1760 = vmatpush.msra.mxu0 0.0
        %1761 = vmatpush.msra.mxu0 0.0
        %1762 = vmatpush.msra.mxu0 0.0
        %1763 = vmatpush.msra.mxu0 0.0
        %1764 = vmatpush.msra.mxu0 0.0
        %1765 = vmatpush.msra.mxu0 0.0
        %1766 = vmatpush.msra.mxu0 0.0
        %1767 = vmatpush.msra.mxu0 0.0
        %1768 = vmatpush.msra.mxu0 0.0
        %1769 = vmatpush.msra.mxu0 %v1750
        %1770 = vmatpush.msra.mxu0 %v1749
        %1771 = vmatpush.msra.mxu0 %v1748
        %1772 = vmatpush.msra.mxu0 %v1747
        %1773 = vmatmul.f32.gmra.mxu0 %v1752
        %v1774 = vpop.f32.mrf.mxu0
        %v1775 = vadd.f32 0.0, %v1774
        %1776 = vmatmul.f32.gmra.mxu0 %v1755
        %v1777 = vpop.f32.mrf.mxu0
        %v1778 = vadd.f32 0.0, %v1777
        %1779 = vdwg.mxu0
        %v1780 = vadd.f32 %v1734, %v1775
        %v1781 = vadd.f32 %v1735, %v1778
        %v1782 = vrot.slane %v1563, 1
        %v1783 = vrot.slane %v1564, 1
        %vm1784 = vcmp.lt.s32.totalorder %v1566, 7
        %v1785 = vsel %vm1784, %v1782, %v1783
        %v1786 = vsel %vm1784, %v1783, %v1782
        %v1787 = vsel %vm1784, 1, 0
        %vm1788 = vcmp.eq.s32.totalorder %v1787, 1
        %v1789 = vsel %vm1788, %v1785, 0.0
        %v1790 = vsel %vm1788, %v1786, 0.0
        %s1791 = scalar_lea.vmem %s800, 160 [#allocation7]
        %v1792 = vld [vmem:[%s1791] sm:$0xff]
        %v1793 = vld [vmem:[%s1791 + $0x8] sm:$0xff]
        %v1794 = vld [vmem:[%s1791 + $0x10] sm:$0xff]
        %v1795 = vld [vmem:[%s1791 + $0x18] sm:$0xff]
        %v1797 = vsel %vm1016, %v1789, 0
        %v1800 = vsel %vm1016, %v1790, 0
        %1802 = vmatpush.msra.mxu0 0.0
        %1803 = vmatpush.msra.mxu0 0.0
        %1804 = vmatpush.msra.mxu0 0.0
        %1805 = vmatpush.msra.mxu0 0.0
        %1806 = vmatpush.msra.mxu0 0.0
        %1807 = vmatpush.msra.mxu0 0.0
        %1808 = vmatpush.msra.mxu0 0.0
        %1809 = vmatpush.msra.mxu0 0.0
        %1810 = vmatpush.msra.mxu0 0.0
        %1811 = vmatpush.msra.mxu0 0.0
        %1812 = vmatpush.msra.mxu0 0.0
        %1813 = vmatpush.msra.mxu0 0.0
        %1814 = vmatpush.msra.mxu0 %v1795
        %1815 = vmatpush.msra.mxu0 %v1794
        %1816 = vmatpush.msra.mxu0 %v1793
        %1817 = vmatpush.msra.mxu0 %v1792
        %1818 = vmatmul.f32.gmra.mxu0 %v1797
        %v1819 = vpop.f32.mrf.mxu0
        %v1820 = vadd.f32 0.0, %v1819
        %1821 = vmatmul.f32.gmra.mxu0 %v1800
        %v1822 = vpop.f32.mrf.mxu0
        %v1823 = vadd.f32 0.0, %v1822
        %1824 = vdwg.mxu0
        %v1825 = vadd.f32 %v1780, %v1820
        %v1826 = vadd.f32 %v1781, %v1823
        %v1827 = vrot.slane %v1563, 2
        %v1828 = vrot.slane %v1564, 2
        %vm1829 = vcmp.lt.s32.totalorder %v1566, 6
        %v1830 = vsel %vm1829, %v1827, %v1828
        %v1831 = vsel %vm1829, %v1828, %v1827
        %v1832 = vsel %vm1829, 1, 0
        %vm1833 = vcmp.eq.s32.totalorder %v1832, 1
        %v1834 = vsel %vm1833, %v1830, 0.0
        %v1835 = vsel %vm1833, %v1831, 0.0
        %s1836 = scalar_lea.vmem %s800, 192 [#allocation7]
        %v1837 = vld [vmem:[%s1836] sm:$0xff]
        %v1838 = vld [vmem:[%s1836 + $0x8] sm:$0xff]
        %v1839 = vld [vmem:[%s1836 + $0x10] sm:$0xff]
        %v1840 = vld [vmem:[%s1836 + $0x18] sm:$0xff]
        %v1842 = vsel %vm1016, %v1834, 0
        %v1845 = vsel %vm1016, %v1835, 0
        %1847 = vmatpush.msra.mxu0 0.0
        %1848 = vmatpush.msra.mxu0 0.0
        %1849 = vmatpush.msra.mxu0 0.0
        %1850 = vmatpush.msra.mxu0 0.0
        %1851 = vmatpush.msra.mxu0 0.0
        %1852 = vmatpush.msra.mxu0 0.0
        %1853 = vmatpush.msra.mxu0 0.0
        %1854 = vmatpush.msra.mxu0 0.0
        %1855 = vmatpush.msra.mxu0 0.0
        %1856 = vmatpush.msra.mxu0 0.0
        %1857 = vmatpush.msra.mxu0 0.0
        %1858 = vmatpush.msra.mxu0 0.0
        %1859 = vmatpush.msra.mxu0 %v1840
        %1860 = vmatpush.msra.mxu0 %v1839
        %1861 = vmatpush.msra.mxu0 %v1838
        %1862 = vmatpush.msra.mxu0 %v1837
        %1863 = vmatmul.f32.gmra.mxu0 %v1842
        %v1864 = vpop.f32.mrf.mxu0
        %v1865 = vadd.f32 0.0, %v1864
        %1866 = vmatmul.f32.gmra.mxu0 %v1845
        %v1867 = vpop.f32.mrf.mxu0
        %v1868 = vadd.f32 0.0, %v1867
        %1869 = vdwg.mxu0
        %v1870 = vadd.f32 %v1825, %v1865
        %v1871 = vadd.f32 %v1826, %v1868
        %v1872 = vrot.slane %v1563, 3
        %v1873 = vrot.slane %v1564, 3
        %vm1874 = vcmp.lt.s32.totalorder %v1566, 5
        %v1875 = vsel %vm1874, %v1872, %v1873
        %v1876 = vsel %vm1874, %v1873, %v1872
        %v1877 = vsel %vm1874, 1, 0
        %vm1878 = vcmp.eq.s32.totalorder %v1877, 1
        %v1879 = vsel %vm1878, %v1875, 0.0
        %v1880 = vsel %vm1878, %v1876, 0.0
        %s1881 = scalar_lea.vmem %s800, 224 [#allocation7]
        %v1882 = vld [vmem:[%s1881] sm:$0xff]
        %v1883 = vld [vmem:[%s1881 + $0x8] sm:$0xff]
        %v1884 = vld [vmem:[%s1881 + $0x10] sm:$0xff]
        %v1885 = vld [vmem:[%s1881 + $0x18] sm:$0xff]
        %v1887 = vsel %vm1016, %v1879, 0
        %v1890 = vsel %vm1016, %v1880, 0
        %1892 = vmatpush.msra.mxu0 0.0
        %1893 = vmatpush.msra.mxu0 0.0
        %1894 = vmatpush.msra.mxu0 0.0
        %1895 = vmatpush.msra.mxu0 0.0
        %1896 = vmatpush.msra.mxu0 0.0
        %1897 = vmatpush.msra.mxu0 0.0
        %1898 = vmatpush.msra.mxu0 0.0
        %1899 = vmatpush.msra.mxu0 0.0
        %1900 = vmatpush.msra.mxu0 0.0
        %1901 = vmatpush.msra.mxu0 0.0
        %1902 = vmatpush.msra.mxu0 0.0
        %1903 = vmatpush.msra.mxu0 0.0
        %1904 = vmatpush.msra.mxu0 %v1885
        %1905 = vmatpush.msra.mxu0 %v1884
        %1906 = vmatpush.msra.mxu0 %v1883
        %1907 = vmatpush.msra.mxu0 %v1882
        %1908 = vmatmul.f32.gmra.mxu0 %v1887
        %v1909 = vpop.f32.mrf.mxu0
        %v1910 = vadd.f32 0.0, %v1909
        %1911 = vmatmul.f32.gmra.mxu0 %v1890
        %v1912 = vpop.f32.mrf.mxu0
        %v1913 = vadd.f32 0.0, %v1912
        %1914 = vdwg.mxu0
        %v1915 = vadd.f32 %v1870, %v1910
        %v1916 = vadd.f32 %v1871, %v1913
        %v1917 = vsel %vm1574, 1, 0
        %vm1918 = vcmp.eq.s32.totalorder %v1917, 1
        %v1919 = vsel %vm1918, %v1575, 0.0
        %v1920 = vsel %vm1918, %v1576, 0.0
        %s1921 = scalar_lea.vmem %s800, 256 [#allocation7]
        %v1922 = vld [vmem:[%s1921] sm:$0xff]
        %v1923 = vld [vmem:[%s1921 + $0x8] sm:$0xff]
        %v1924 = vld [vmem:[%s1921 + $0x10] sm:$0xff]
        %v1925 = vld [vmem:[%s1921 + $0x18] sm:$0xff]
        %v1927 = vsel %vm1016, %v1919, 0
        %v1930 = vsel %vm1016, %v1920, 0
        %1932 = vmatpush.msra.mxu0 0.0
        %1933 = vmatpush.msra.mxu0 0.0
        %1934 = vmatpush.msra.mxu0 0.0
        %1935 = vmatpush.msra.mxu0 0.0
        %1936 = vmatpush.msra.mxu0 0.0
        %1937 = vmatpush.msra.mxu0 0.0
        %1938 = vmatpush.msra.mxu0 0.0
        %1939 = vmatpush.msra.mxu0 0.0
        %1940 = vmatpush.msra.mxu0 0.0
        %1941 = vmatpush.msra.mxu0 0.0
        %1942 = vmatpush.msra.mxu0 0.0
        %1943 = vmatpush.msra.mxu0 0.0
        %1944 = vmatpush.msra.mxu0 %v1925
        %1945 = vmatpush.msra.mxu0 %v1924
        %1946 = vmatpush.msra.mxu0 %v1923
        %1947 = vmatpush.msra.mxu0 %v1922
        %1948 = vmatmul.f32.gmra.mxu0 %v1927
        %v1949 = vpop.f32.mrf.mxu0
        %v1950 = vadd.f32 0.0, %v1949
        %1951 = vmatmul.f32.gmra.mxu0 %v1930
        %v1952 = vpop.f32.mrf.mxu0
        %v1953 = vadd.f32 0.0, %v1952
        %1954 = vdwg.mxu0
        %v1955 = vadd.f32 %v1915, %v1950
        %v1956 = vadd.f32 %v1916, %v1953
        %v1957 = vld [vmem:[%s809] sm:$0x1]
        %v1959 = vperm.slane %v1957, 0
        %v1961 = vadd.f32 %v1955, %v1959
        %v1962 = vadd.f32 %v1956, %v1959
        %v1963 = vmax.f32 %v1961, 0.0
        %v1964 = vmax.f32 %v1962, 0.0
        %v1965 = vld [vmem:[%s982] sm:$0xff]
        %v1966 = vld [vmem:[%s982 + $0x8] sm:$0xff]
        %v1967 = vld [vmem:[%s982 + $0x10] sm:$0xff]
        %v1968 = vld [vmem:[%s982 + $0x18] sm:$0xff]
        %v1969 = vld [vmem:[%s982 + $0x20] sm:$0xff]
        %v1970 = vld [vmem:[%s982 + $0x28] sm:$0xff]
        %v1971 = vld [vmem:[%s982 + $0x30] sm:$0xff]
        %v1972 = vld [vmem:[%s982 + $0x38] sm:$0xff]
        %v1973 = vld [vmem:[%s985] sm:$0x1]
        %v1975 = vperm.slane %v1973, 0
        %vm1977 = vcmask 523264
        %v1979 = vsel %vm1977, %v1963, 0
        %v1982 = vsel %vm1977, %v1964, 0
        %1984 = vmatpush.msra.mxu0 0.0
        %1985 = vmatpush.msra.mxu0 0.0
        %1986 = vmatpush.msra.mxu0 0.0
        %1987 = vmatpush.msra.mxu0 0.0
        %1988 = vmatpush.msra.mxu0 0.0
        %1989 = vmatpush.msra.mxu0 0.0
        %1990 = vmatpush.msra.mxu0 0.0
        %1991 = vmatpush.msra.mxu0 0.0
        %1992 = vmatpush.msra.mxu0 %v1972
        %1993 = vmatpush.msra.mxu0 %v1971
        %1994 = vmatpush.msra.mxu0 %v1970
        %1995 = vmatpush.msra.mxu0 %v1969
        %1996 = vmatpush.msra.mxu0 %v1968
        %1997 = vmatpush.msra.mxu0 %v1967
        %1998 = vmatpush.msra.mxu0 %v1966
        %1999 = vmatpush.msra.mxu0 %v1965
        %2000 = vmatmul.f32.gmra.mxu0 %v1979
        %v2001 = vpop.f32.mrf.mxu0
        %v2002 = vadd.f32 %v1975, %v2001
        %2003 = vmatmul.f32.gmra.mxu0 %v1982
        %v2004 = vpop.f32.mrf.mxu0
        %v2005 = vadd.f32 %v1975, %v2004
        %2006 = vdwg.mxu0
        %v2007 = vadd.f32 %v2002, %v1563
        %v2008 = vadd.f32 %v2005, %v1564
        %v2009 = vld [vmem:[%s988] sm:$0x1]
        %v2010 = vld [vmem:[%s991] sm:$0x1]
        %v2011 = vsel %vm1016, %v2007, 0.0
        %2012 = vadd.xlane.f32.xlu0 %v2011
        %v2013 = vpop.xlane.xlu0 %2012
        %v2014 = vsel %vm1016, %v2008, 0.0
        %2015 = vadd.xlane.f32.xlu0 %v2014
        %v2016 = vpop.xlane.xlu0 %2015
        %v2017 = vmul.f32 %v2013, %v1504
        %v2018 = vmul.f32 %v2016, %v1504
        %v2019 = vsub.f32 %v2007, %v2017
        %v2020 = vsub.f32 %v2008, %v2018
        %v2021 = vmul.f32 %v2019, %v2019
        %v2022 = vmul.f32 %v2020, %v2020
        %v2023 = vsel %vm1016, %v2021, 0.0
        %2024 = vadd.xlane.f32.xlu0 %v2023
        %v2025 = vpop.xlane.xlu0 %2024
        %v2026 = vsel %vm1016, %v2022, 0.0
        %2027 = vadd.xlane.f32.xlu0 %v2026
        %v2028 = vpop.xlane.xlu0 %2027
        %v2029 = vmul.f32 %v2025, %v1504
        %v2030 = vmul.f32 %v2028, %v1504
        %v2031 = vadd.f32 %v2029, 1e-05
        %v2032 = vadd.f32 %v2030, 1e-05
        %v2033 = vrsqrt.pop %v2031
        %v2034 = vmul.f32 %v2033, %v2031
        %v2035 = vmul.f32 %v2034, %v2033
        %v2036 = vmul.f32 0.5, %v2035
        %v2037 = vsub.f32 1.5, %v2036
        %v2038 = vmul.f32 %v2033, %v2037
        %vm2039 = vweird.f32 %v2031
        %vm2040 = vweird.f32 %v2033
        %vm2041 = vmor %vm2039, %vm2040
        %v2042 = vsel %vm2041, %v2033, %v2038
        %v2043 = vrsqrt.pop %v2032
        %v2044 = vmul.f32 %v2043, %v2032
        %v2045 = vmul.f32 %v2044, %v2043
        %v2046 = vmul.f32 0.5, %v2045
        %v2047 = vsub.f32 1.5, %v2046
        %v2048 = vmul.f32 %v2043, %v2047
        %vm2049 = vweird.f32 %v2032
        %vm2050 = vweird.f32 %v2043
        %vm2051 = vmor %vm2049, %vm2050
        %v2052 = vsel %vm2051, %v2043, %v2048
        %v2053 = vmul.f32 %v2019, %v2042
        %v2054 = vmul.f32 %v2020, %v2052
        %v2056 = vperm.slane %v2009, 0
        %v2058 = vmul.f32 %v2053, %v2056
        %v2059 = vmul.f32 %v2054, %v2056
        %v2061 = vperm.slane %v2010, 0
        %v2063 = vadd.f32 %v2058, %v2061
        %v2064 = vadd.f32 %v2059, %v2061
        %v2065 = vmul.f32 %v2063, %v1556
        %v2066 = vmul.f32 %v2064, %v1561
        %2067 = vst.msk [vmem:[#allocation10] sm:$0xff] %vm1016, %v2065
        %2068 = vst.msk [vmem:[#allocation10 + $0x8] sm:$0xff] %vm1016, %v2066
        // Predicated region
        $region117: #{tpu_custom_call.1} parent=95 // pred_check
          %p2069 = pneg %p564
        $region118: #{tpu_custom_call.1} parent=95 // pred_check_branch
          %2071 = sbr.rel (%p2069) target = $region120
        $region119: #{tpu_custom_call.1} parent=95 // pred_region
          %s2072 = smul.u32 2, %s44
          %2074 = vsyncadd [#allocation4], 0
          %s2075 = smul.addr %s2072, 8
          %s2076 = scalar_lea.hbm %s19, %s2075
          %s2077 = sshll.u32 [#allocation10], 4
          %s2078 = int_to_ptr.vmem [resolvable:$true] %s2077
          %s2079 = sshll.u32 %s2076, 4
          %s2080 = int_to_ptr.hbm [resolvable:$true] %s2079
          %2085 = dma.vmem_to_hbm [thread:$0]  %s2078, 256, %s2080, [#allocation4], 128, 128, 8
        $region120: #{tpu_custom_call.1} parent=95 // pred_fallthru
          _
        // Predicated region
        $region121: #{tpu_custom_call.1} parent=95 // pred_check
          %p2086 = pneg %p564
        $region122: #{tpu_custom_call.1} parent=95 // pred_check_branch
          %2088 = sbr.rel (%p2086) target = $region124
        $region123: #{tpu_custom_call.1} parent=95 // pred_region
          %2090 = dma.done [#allocation4], 256
        $region124: #{tpu_custom_call.1} parent=95 // pred_fallthru
          _
      $region96: #{tpu_custom_call.1} parent=5 // pred_fallthru
        _
      %p2091 = scmp.le.s32.totalorder 2, %s35
      // Predicated region
      $region125: #{tpu_custom_call.1} parent=5 // pred_check
        %p2092 = pneg %p2091
      $region126: #{tpu_custom_call.1} parent=5 // pred_check_branch
        %2094 = sbr.rel (%p2092) target = $region128
      $region127: #{tpu_custom_call.1} parent=5 // pred_region
        %s2095 = ssub.s32 %s35, 2
      $region128: #{tpu_custom_call.1} parent=5 // pred_fallthru
        _
    $region6: #{tpu_custom_call.1} parent=1 // loop_footer
      %s39 = sadd.s32 1, %s35
    $region7: #{tpu_custom_call.1} parent=1 // loop_footer_branch
      %34 = sbr.rel target = $region3
    $region8: #{tpu_custom_call.1} parent=1 // loop_exit
      _
    %2096 = vsyncpa [#allocation3], 1
    %s2097 = scalar_lea.sflag [#allocation3], 1
    %2098 = vsyncpa %s2097, 1
    %2099 = vsyncpa [#allocation6], 1
    %s2100 = scalar_lea.sflag [#allocation6], 1
    %2101 = vsyncpa %s2100, 1
    %2102 = vsyncpa [#allocation9], 1
    %s2103 = scalar_lea.sflag [#allocation9], 1
    %2104 = vsyncpa %s2103, 1
    %2105 = vsyncpa [#allocation4], 1
    %s2106 = scalar_lea.sflag [#allocation4], 1
    %2107 = vsyncpa %s2106, 1

</llo_original>
